<compile_context>
chip_gen: v6e
topology: v6e:2x2x1
jax: 0.10.0
libtpu: 0.0.40
codegen_flags: <defaults>
</compile_context>

<pallas_src>
import math

import jax
import jax.numpy as jnp
import numpy as np
from jax.experimental import pallas as pl
from jax.experimental.pallas import tpu as pltpu

VOCAB = 50
SEQ = 8
BATCH = 2
HIDDEN = 32
EMB = 128
CELL = 32
GATES = 4 * CELL          # packed, lane-dense gate columns: [f*32 | i*32 | o*32 | C]
VPAD = 128                # vocab padded to one full lane group


# ---------------------------------------------------------------------------
# Fused kernel: embedding gather + forward direction + backward direction +
# output projection + log-softmax.  Runs once (no grid); everything in VMEM.
# ---------------------------------------------------------------------------
def _bilstm_fused_kernel(x_ref, emb_ref, wx_ref, bx_ref, wh1_ref, wh2_ref,
                         wo_ref, bo_ref, out_ref):
    # ---- in-kernel embedding gather: 16 dynamic (1, E) row loads from VMEM ----
    rows = [emb_ref[pl.ds(x_ref[r], 1), :] for r in range(SEQ * BATCH)]
    enc_bf = jnp.concatenate(rows, axis=0).astype(jnp.bfloat16)    # (S*B, E)

    # ---- hoisted x-part of the gate pre-activations, both directions fused:
    # one lane-dense (S*B, E) x (E, 256) bf16 MXU matmul, outside the recurrence.
    xz = jnp.dot(enc_bf, wx_ref[...], preferred_element_type=jnp.float32) + bx_ref[...]
    xz1 = xz[:, :GATES]                                            # forward dir
    xz2 = xz[:, GATES:]                                            # backward dir

    wh1 = wh1_ref[...]                                             # (H, 128) bf16
    wh2 = wh2_ref[...]

    def cell(h, c, xz_t, wh):
        # z: (B, 128); gate columns pre-replicated so the slices are already
        # (B, CELL) -- no lane broadcast on the serial path.  bf16 MXU, f32 acc.
        z = jnp.dot(h.astype(jnp.bfloat16), wh,
                    preferred_element_type=jnp.float32) + xz_t
        g = jax.nn.sigmoid(z[:, :3 * CELL])                        # one EUP issue: f|i|o
        f_t = g[:, 0:CELL]
        i_t = g[:, CELL:2 * CELL]
        o_t = g[:, 2 * CELL:3 * CELL]
        c_cand = jnp.tanh(z[:, 3 * CELL:4 * CELL])
        c_new = f_t * c + i_t + c_cand                             # (sic) i_t is added
        return o_t * jnp.tanh(c_new), c_new

    # ---- forward direction (fully unrolled, S = 8), total_h1 in vregs ----
    h = jnp.zeros((BATCH, HIDDEN), jnp.float32)
    c = jnp.zeros((BATCH, CELL), jnp.float32)
    th1 = []
    for t in range(SEQ):
        th1.append(h)                                              # total_h1[t] = h (pre-update)
        if t == SEQ - 1:
            break                                                  # last step is not applied
        h, c = cell(h, c, xz1[t * BATCH:(t + 1) * BATCH, :], wh1)

    # ---- backward direction: h re-zeroed, C carried over from forward (sic) ----
    h = jnp.zeros((BATCH, HIDDEN), jnp.float32)
    th2 = [None] * SEQ
    for t in range(SEQ):
        s = SEQ - 1 - t
        th2[s] = h                                                 # total_h2[S-1-t] = h
        if t == SEQ - 1:
            break
        h, c = cell(h, c, xz2[s * BATCH:(s + 1) * BATCH, :], wh2)

    # ---- fused output projection + log-softmax (register-resident total_h) ----
    th = jnp.concatenate(
        [jnp.concatenate([th1[t], th2[t]], axis=1) for t in range(SEQ)],
        axis=0).astype(jnp.bfloat16)                               # (S*B, 2H)
    a = (jnp.dot(th, wo_ref[...], preferred_element_type=jnp.float32)
         + bo_ref[...])                                            # padded lanes get -1e30
    m = jnp.max(a, axis=1, keepdims=True)
    lse = m + jnp.log(jnp.sum(jnp.exp(a - m), axis=1, keepdims=True))
    out_ref[...] = a - lse


@jax.jit
def bilstm_forward(x, kp):
    S, B = x.shape
    x_flat = x.reshape(S * B).astype(jnp.int32)                    # row r = t*B + b
    vmem = pl.BlockSpec(memory_space=pltpu.MemorySpace.VMEM)
    smem = pl.BlockSpec(memory_space=pltpu.MemorySpace.SMEM)
    out = pl.pallas_call(
        _bilstm_fused_kernel,
        out_shape=jax.ShapeDtypeStruct((S * B, VPAD), jnp.float32),
        in_specs=[smem, vmem, vmem, vmem, vmem, vmem, vmem, vmem],
        out_specs=vmem,
    )(x_flat, kp["emb"], kp["wx"], kp["bx"], kp["wh1"], kp["wh2"],
      kp["wo"], kp["bo"])
    return out.reshape(S, B, VPAD)[:, :, :VOCAB]


# ---------------------------------------------------------------------------
# Parameters: raw (module-like) params + packing into the kernel layout.
# ---------------------------------------------------------------------------
def make_params(key):
    stdv = 1.0 / math.sqrt(HIDDEN)
    names_shapes = [
        ("emb", (VOCAB, EMB)),
        ("wf1", (HIDDEN + EMB, 1)), ("bf1", (1,)),
        ("wi1", (HIDDEN + EMB, 1)), ("bi1", (1,)),
        ("wc1", (HIDDEN + EMB, CELL)), ("bc1", (CELL,)),
        ("wo1", (HIDDEN + EMB, 1)), ("bo1", (1,)),
        ("wf2", (HIDDEN + EMB, 1)), ("bf2", (1,)),
        ("wi2", (HIDDEN + EMB, 1)), ("bi2", (1,)),
        ("wc2", (HIDDEN + EMB, CELL)), ("bc2", (CELL,)),
        ("wo2", (HIDDEN + EMB, 1)), ("bo2", (1,)),
        ("w_out", (2 * HIDDEN, VOCAB)), ("b_out", (VOCAB,)),
    ]
    keys = jax.random.split(key, len(names_shapes))
    u = lambda k, s: jax.random.uniform(k, s, jnp.float32, -stdv, stdv)
    return {n: u(k, s) for (n, s), k in zip(names_shapes, keys)}


def pack_params(p):
    """Pack raw params into the lane-dense kernel layout."""
    def pack_dir(wf, bf, wi, bi, wog, bog, wc, bc):
        # Columns: [f replicated CELL | i replicated CELL | o replicated CELL | C].
        w = jnp.concatenate([
            jnp.tile(wf, (1, CELL)),
            jnp.tile(wi, (1, CELL)),
            jnp.tile(wog, (1, CELL)),
            wc,
        ], axis=1)                                        # (H+E, 128)
        b = jnp.concatenate([
            jnp.tile(bf.reshape(1, 1), (1, CELL)),
            jnp.tile(bi.reshape(1, 1), (1, CELL)),
            jnp.tile(bog.reshape(1, 1), (1, CELL)),
            bc.reshape(1, CELL),
        ], axis=1)                                        # (1, 128) f32
        wh = w[:HIDDEN, :].astype(jnp.bfloat16)           # h rows -> bf16 MXU serial path
        wx = w[HIDDEN:, :].astype(jnp.bfloat16)           # x rows -> bf16 MXU hoisted path
        return wh, wx, b

    wh1, wx1, b1 = pack_dir(p["wf1"], p["bf1"], p["wi1"], p["bi1"],
                            p["wo1"], p["bo1"], p["wc1"], p["bc1"])
    wh2, wx2, b2 = pack_dir(p["wf2"], p["bf2"], p["wi2"], p["bi2"],
                            p["wo2"], p["bo2"], p["wc2"], p["bc2"])
    # Both directions' x-weights fused along lanes: one 256-wide MXU pass.
    wx = jnp.concatenate([wx1, wx2], axis=1)              # (E, 256) bf16
    bx = jnp.concatenate([b1, b2], axis=1)                # (1, 256) f32
    # Output projection padded to 128 lanes; padded logits forced to -1e30 via bias.
    wo_p = jnp.zeros((2 * HIDDEN, VPAD), jnp.float32).at[:, :VOCAB].set(p["w_out"])
    wo_p = wo_p.astype(jnp.bfloat16)
    bo_p = jnp.full((1, VPAD), -1e30, jnp.float32).at[0, :VOCAB].set(p["b_out"])
    return dict(emb=p["emb"], wx=wx, bx=bx, wh1=wh1, wh2=wh2, wo=wo_p, bo=bo_p)


# ---------------------------------------------------------------------------
# Pure-JAX reference (mirrors the PyTorch forward, eval mode) on raw params.
# ---------------------------------------------------------------------------
def reference_forward(x, p):
    encode = p["emb"][x]
    S, B = x.shape

    def cell(h, c, step, wf, bf, wi, bi, wc, bc, wog, bog):
        hx = jnp.concatenate([h, step], axis=1)
        f = jax.nn.sigmoid(hx @ wf + bf)                 # (B, 1) -> broadcast
        i = jax.nn.sigmoid(hx @ wi + bi)
        cc = jnp.tanh(hx @ wc + bc)                      # (B, CELL)
        c_new = f * c + i + cc
        o = jax.nn.sigmoid(hx @ wog + bog)
        return o * jnp.tanh(c_new), c_new

    h = jnp.zeros((B, HIDDEN)); c = jnp.zeros((B, CELL))
    th1 = []
    for t in range(S):
        th1.append(h)
        if t == S - 1:
            break
        h, c = cell(h, c, encode[t], p["wf1"], p["bf1"], p["wi1"], p["bi1"],
                    p["wc1"], p["bc1"], p["wo1"], p["bo1"])
    th1 = jnp.stack(th1)

    h = jnp.zeros((B, HIDDEN))
    th2 = [None] * S
    for t in range(S):
        th2[S - 1 - t] = h
        if t == S - 1:
            break
        h, c = cell(h, c, encode[S - 1 - t], p["wf2"], p["bf2"], p["wi2"], p["bi2"],
                    p["wc2"], p["bc2"], p["wo2"], p["bo2"])
    th2 = jnp.stack(th2)

    a = jnp.concatenate([th1, th2], axis=2) @ p["w_out"] + p["b_out"]
    m = jnp.max(a, axis=2, keepdims=True)
    lse = m + jnp.log(jnp.sum(jnp.exp(a - m), axis=2, keepdims=True))
    return a - lse


if __name__ == "__main__":
    key = jax.random.PRNGKey(0)
    pkey, xkey = jax.random.split(key)
    raw = make_params(pkey)
    kp = pack_params(raw)
    x = jax.random.randint(xkey, (SEQ, BATCH), 0, VOCAB, dtype=jnp.int32)

    out = bilstm_forward(x, kp)
    out = jax.block_until_ready(out)

    ref = reference_forward(x, raw)
    np.testing.assert_allclose(np.asarray(out), np.asarray(ref), rtol=2e-2, atol=2e-2)
    assert out.shape == (SEQ, BATCH, VOCAB)
    print("KERNEL_OK")
</pallas_src>

<mosaic_0001>
module attributes {stable_mosaic.version = 11 : i64} {
  func.func @_bilstm_fused_kernel(%arg0: memref<16xi32, #tpu.memory_space<smem>>, %arg1: memref<50x128xf32, #tpu.memory_space<vmem>>, %arg2: memref<128x256xbf16, #tpu.memory_space<vmem>>, %arg3: memref<1x256xf32, #tpu.memory_space<vmem>>, %arg4: memref<32x128xbf16, #tpu.memory_space<vmem>>, %arg5: memref<32x128xbf16, #tpu.memory_space<vmem>>, %arg6: memref<64x128xbf16, #tpu.memory_space<vmem>>, %arg7: memref<1x128xf32, #tpu.memory_space<vmem>>, %arg8: memref<16x128xf32, #tpu.memory_space<vmem>>) attributes {dimension_semantics = [], scalar_prefetch = 0 : i64, scratch_operands = 0 : i64, tpu.core_type = #tpu.core_type<tc>} {
    %c0 = arith.constant 0 : index
    %0 = memref.load %arg0[%c0] : memref<16xi32, #tpu.memory_space<smem>>
    %1 = arith.index_cast %0 : i32 to index
    %c0_0 = arith.constant 0 : index
    %2 = vector.load %arg1[%1, %c0_0] : memref<50x128xf32, #tpu.memory_space<vmem>>, vector<1x128xf32>
    %c1 = arith.constant 1 : index
    %3 = memref.load %arg0[%c1] : memref<16xi32, #tpu.memory_space<smem>>
    %4 = arith.index_cast %3 : i32 to index
    %c0_1 = arith.constant 0 : index
    %5 = vector.load %arg1[%4, %c0_1] : memref<50x128xf32, #tpu.memory_space<vmem>>, vector<1x128xf32>
    %c2 = arith.constant 2 : index
    %6 = memref.load %arg0[%c2] : memref<16xi32, #tpu.memory_space<smem>>
    %7 = arith.index_cast %6 : i32 to index
    %c0_2 = arith.constant 0 : index
    %8 = vector.load %arg1[%7, %c0_2] : memref<50x128xf32, #tpu.memory_space<vmem>>, vector<1x128xf32>
    %c3 = arith.constant 3 : index
    %9 = memref.load %arg0[%c3] : memref<16xi32, #tpu.memory_space<smem>>
    %10 = arith.index_cast %9 : i32 to index
    %c0_3 = arith.constant 0 : index
    %11 = vector.load %arg1[%10, %c0_3] : memref<50x128xf32, #tpu.memory_space<vmem>>, vector<1x128xf32>
    %c4 = arith.constant 4 : index
    %12 = memref.load %arg0[%c4] : memref<16xi32, #tpu.memory_space<smem>>
    %13 = arith.index_cast %12 : i32 to index
    %c0_4 = arith.constant 0 : index
    %14 = vector.load %arg1[%13, %c0_4] : memref<50x128xf32, #tpu.memory_space<vmem>>, vector<1x128xf32>
    %c5 = arith.constant 5 : index
    %15 = memref.load %arg0[%c5] : memref<16xi32, #tpu.memory_space<smem>>
    %16 = arith.index_cast %15 : i32 to index
    %c0_5 = arith.constant 0 : index
    %17 = vector.load %arg1[%16, %c0_5] : memref<50x128xf32, #tpu.memory_space<vmem>>, vector<1x128xf32>
    %c6 = arith.constant 6 : index
    %18 = memref.load %arg0[%c6] : memref<16xi32, #tpu.memory_space<smem>>
    %19 = arith.index_cast %18 : i32 to index
    %c0_6 = arith.constant 0 : index
    %20 = vector.load %arg1[%19, %c0_6] : memref<50x128xf32, #tpu.memory_space<vmem>>, vector<1x128xf32>
    %c7 = arith.constant 7 : index
    %21 = memref.load %arg0[%c7] : memref<16xi32, #tpu.memory_space<smem>>
    %22 = arith.index_cast %21 : i32 to index
    %c0_7 = arith.constant 0 : index
    %23 = vector.load %arg1[%22, %c0_7] : memref<50x128xf32, #tpu.memory_space<vmem>>, vector<1x128xf32>
    %c8 = arith.constant 8 : index
    %24 = memref.load %arg0[%c8] : memref<16xi32, #tpu.memory_space<smem>>
    %25 = arith.index_cast %24 : i32 to index
    %c0_8 = arith.constant 0 : index
    %26 = vector.load %arg1[%25, %c0_8] : memref<50x128xf32, #tpu.memory_space<vmem>>, vector<1x128xf32>
    %c9 = arith.constant 9 : index
    %27 = memref.load %arg0[%c9] : memref<16xi32, #tpu.memory_space<smem>>
    %28 = arith.index_cast %27 : i32 to index
    %c0_9 = arith.constant 0 : index
    %29 = vector.load %arg1[%28, %c0_9] : memref<50x128xf32, #tpu.memory_space<vmem>>, vector<1x128xf32>
    %c10 = arith.constant 10 : index
    %30 = memref.load %arg0[%c10] : memref<16xi32, #tpu.memory_space<smem>>
    %31 = arith.index_cast %30 : i32 to index
    %c0_10 = arith.constant 0 : index
    %32 = vector.load %arg1[%31, %c0_10] : memref<50x128xf32, #tpu.memory_space<vmem>>, vector<1x128xf32>
    %c11 = arith.constant 11 : index
    %33 = memref.load %arg0[%c11] : memref<16xi32, #tpu.memory_space<smem>>
    %34 = arith.index_cast %33 : i32 to index
    %c0_11 = arith.constant 0 : index
    %35 = vector.load %arg1[%34, %c0_11] : memref<50x128xf32, #tpu.memory_space<vmem>>, vector<1x128xf32>
    %c12 = arith.constant 12 : index
    %36 = memref.load %arg0[%c12] : memref<16xi32, #tpu.memory_space<smem>>
    %37 = arith.index_cast %36 : i32 to index
    %c0_12 = arith.constant 0 : index
    %38 = vector.load %arg1[%37, %c0_12] : memref<50x128xf32, #tpu.memory_space<vmem>>, vector<1x128xf32>
    %c13 = arith.constant 13 : index
    %39 = memref.load %arg0[%c13] : memref<16xi32, #tpu.memory_space<smem>>
    %40 = arith.index_cast %39 : i32 to index
    %c0_13 = arith.constant 0 : index
    %41 = vector.load %arg1[%40, %c0_13] : memref<50x128xf32, #tpu.memory_space<vmem>>, vector<1x128xf32>
    %c14 = arith.constant 14 : index
    %42 = memref.load %arg0[%c14] : memref<16xi32, #tpu.memory_space<smem>>
    %43 = arith.index_cast %42 : i32 to index
    %c0_14 = arith.constant 0 : index
    %44 = vector.load %arg1[%43, %c0_14] : memref<50x128xf32, #tpu.memory_space<vmem>>, vector<1x128xf32>
    %c15 = arith.constant 15 : index
    %45 = memref.load %arg0[%c15] : memref<16xi32, #tpu.memory_space<smem>>
    %46 = arith.index_cast %45 : i32 to index
    %c0_15 = arith.constant 0 : index
    %47 = vector.load %arg1[%46, %c0_15] : memref<50x128xf32, #tpu.memory_space<vmem>>, vector<1x128xf32>
    %48 = tpu.concatenate %2, %5, %8, %11, %14, %17, %20, %23, %26, %29, %32, %35, %38, %41, %44, %47 in 0 : vector<1x128xf32>, vector<1x128xf32>, vector<1x128xf32>, vector<1x128xf32>, vector<1x128xf32>, vector<1x128xf32>, vector<1x128xf32>, vector<1x128xf32>, vector<1x128xf32>, vector<1x128xf32>, vector<1x128xf32>, vector<1x128xf32>, vector<1x128xf32>, vector<1x128xf32>, vector<1x128xf32>, vector<1x128xf32> -> vector<16x128xf32>
    %49 = arith.truncf %48 : vector<16x128xf32> to vector<16x128xbf16>
    %c0_16 = arith.constant 0 : index
    %c0_17 = arith.constant 0 : index
    %50 = vector.load %arg2[%c0_16, %c0_17] : memref<128x256xbf16, #tpu.memory_space<vmem>>, vector<128x256xbf16>
    %cst = arith.constant dense<0.000000e+00> : vector<16x256xf32>
    %51 = tpu.matmul %49, %50, %cst {dimension_numbers = #tpu.dot_dimension_numbers<[1], [0], [0], [1], [0, 0, 1, 1], [], []>} : vector<16x128xbf16>, vector<128x256xbf16>, vector<16x256xf32> -> vector<16x256xf32>
    %c0_18 = arith.constant 0 : index
    %c0_19 = arith.constant 0 : index
    %52 = vector.load %arg3[%c0_18, %c0_19] : memref<1x256xf32, #tpu.memory_space<vmem>>, vector<1x256xf32>
    %53 = vector.broadcast %52 : vector<1x256xf32> to vector<16x256xf32>
    %54 = arith.addf %51, %53 : vector<16x256xf32>
    %55 = vector.extract_strided_slice %54 {offsets = [0, 0], sizes = [16, 128], strides = [1, 1]} : vector<16x256xf32> to vector<16x128xf32>
    %56 = vector.extract_strided_slice %54 {offsets = [0, 128], sizes = [16, 128], strides = [1, 1]} : vector<16x256xf32> to vector<16x128xf32>
    %c0_20 = arith.constant 0 : index
    %c0_21 = arith.constant 0 : index
    %57 = vector.load %arg4[%c0_20, %c0_21] : memref<32x128xbf16, #tpu.memory_space<vmem>>, vector<32x128xbf16>
    %c0_22 = arith.constant 0 : index
    %c0_23 = arith.constant 0 : index
    %58 = vector.load %arg5[%c0_22, %c0_23] : memref<32x128xbf16, #tpu.memory_space<vmem>>, vector<32x128xbf16>
    %cst_24 = arith.constant 0.000000e+00 : f32
    %59 = vector.broadcast %cst_24 : f32 to vector<2x32xf32>
    %cst_25 = arith.constant 0.000000e+00 : f32
    %60 = vector.broadcast %cst_25 : f32 to vector<2x32xf32>
    %61 = vector.extract_strided_slice %55 {offsets = [0, 0], sizes = [2, 128], strides = [1, 1]} : vector<16x128xf32> to vector<2x128xf32>
    %62 = arith.truncf %59 : vector<2x32xf32> to vector<2x32xbf16>
    %cst_26 = arith.constant dense<0.000000e+00> : vector<2x128xf32>
    %63 = tpu.matmul %62, %57, %cst_26 {dimension_numbers = #tpu.dot_dimension_numbers<[1], [0], [0], [1], [0, 0, 1, 1], [], []>} : vector<2x32xbf16>, vector<32x128xbf16>, vector<2x128xf32> -> vector<2x128xf32>
    %64 = arith.addf %63, %61 : vector<2x128xf32>
    %65 = vector.extract_strided_slice %64 {offsets = [0, 0], sizes = [2, 96], strides = [1, 1]} : vector<2x128xf32> to vector<2x96xf32>
    %66 = arith.negf %65 : vector<2x96xf32>
    %67 = math.exp %66 : vector<2x96xf32>
    %cst_27 = arith.constant 1.000000e+00 : f32
    %68 = vector.broadcast %cst_27 : f32 to vector<2x96xf32>
    %69 = arith.addf %68, %67 : vector<2x96xf32>
    %70 = arith.divf %68, %69 : vector<2x96xf32>
    %71 = vector.extract_strided_slice %70 {offsets = [0, 0], sizes = [2, 32], strides = [1, 1]} : vector<2x96xf32> to vector<2x32xf32>
    %72 = vector.extract_strided_slice %70 {offsets = [0, 32], sizes = [2, 32], strides = [1, 1]} : vector<2x96xf32> to vector<2x32xf32>
    %73 = vector.extract_strided_slice %70 {offsets = [0, 64], sizes = [2, 32], strides = [1, 1]} : vector<2x96xf32> to vector<2x32xf32>
    %74 = vector.extract_strided_slice %64 {offsets = [0, 96], sizes = [2, 32], strides = [1, 1]} : vector<2x128xf32> to vector<2x32xf32>
    %75 = math.tanh %74 : vector<2x32xf32>
    %76 = arith.mulf %71, %60 : vector<2x32xf32>
    %77 = arith.addf %76, %72 : vector<2x32xf32>
    %78 = arith.addf %77, %75 : vector<2x32xf32>
    %79 = math.tanh %78 : vector<2x32xf32>
    %80 = arith.mulf %73, %79 : vector<2x32xf32>
    %81 = vector.extract_strided_slice %55 {offsets = [2, 0], sizes = [2, 128], strides = [1, 1]} : vector<16x128xf32> to vector<2x128xf32>
    %82 = arith.truncf %80 : vector<2x32xf32> to vector<2x32xbf16>
    %cst_28 = arith.constant dense<0.000000e+00> : vector<2x128xf32>
    %83 = tpu.matmul %82, %57, %cst_28 {dimension_numbers = #tpu.dot_dimension_numbers<[1], [0], [0], [1], [0, 0, 1, 1], [], []>} : vector<2x32xbf16>, vector<32x128xbf16>, vector<2x128xf32> -> vector<2x128xf32>
    %84 = arith.addf %83, %81 : vector<2x128xf32>
    %85 = vector.extract_strided_slice %84 {offsets = [0, 0], sizes = [2, 96], strides = [1, 1]} : vector<2x128xf32> to vector<2x96xf32>
    %86 = arith.negf %85 : vector<2x96xf32>
    %87 = math.exp %86 : vector<2x96xf32>
    %cst_29 = arith.constant 1.000000e+00 : f32
    %88 = vector.broadcast %cst_29 : f32 to vector<2x96xf32>
    %89 = arith.addf %88, %87 : vector<2x96xf32>
    %90 = arith.divf %88, %89 : vector<2x96xf32>
    %91 = vector.extract_strided_slice %90 {offsets = [0, 0], sizes = [2, 32], strides = [1, 1]} : vector<2x96xf32> to vector<2x32xf32>
    %92 = vector.extract_strided_slice %90 {offsets = [0, 32], sizes = [2, 32], strides = [1, 1]} : vector<2x96xf32> to vector<2x32xf32>
    %93 = vector.extract_strided_slice %90 {offsets = [0, 64], sizes = [2, 32], strides = [1, 1]} : vector<2x96xf32> to vector<2x32xf32>
    %94 = vector.extract_strided_slice %84 {offsets = [0, 96], sizes = [2, 32], strides = [1, 1]} : vector<2x128xf32> to vector<2x32xf32>
    %95 = math.tanh %94 : vector<2x32xf32>
    %96 = arith.mulf %91, %78 : vector<2x32xf32>
    %97 = arith.addf %96, %92 : vector<2x32xf32>
    %98 = arith.addf %97, %95 : vector<2x32xf32>
    %99 = math.tanh %98 : vector<2x32xf32>
    %100 = arith.mulf %93, %99 : vector<2x32xf32>
    %101 = vector.extract_strided_slice %55 {offsets = [4, 0], sizes = [2, 128], strides = [1, 1]} : vector<16x128xf32> to vector<2x128xf32>
    %102 = arith.truncf %100 : vector<2x32xf32> to vector<2x32xbf16>
    %cst_30 = arith.constant dense<0.000000e+00> : vector<2x128xf32>
    %103 = tpu.matmul %102, %57, %cst_30 {dimension_numbers = #tpu.dot_dimension_numbers<[1], [0], [0], [1], [0, 0, 1, 1], [], []>} : vector<2x32xbf16>, vector<32x128xbf16>, vector<2x128xf32> -> vector<2x128xf32>
    %104 = arith.addf %103, %101 : vector<2x128xf32>
    %105 = vector.extract_strided_slice %104 {offsets = [0, 0], sizes = [2, 96], strides = [1, 1]} : vector<2x128xf32> to vector<2x96xf32>
    %106 = arith.negf %105 : vector<2x96xf32>
    %107 = math.exp %106 : vector<2x96xf32>
    %cst_31 = arith.constant 1.000000e+00 : f32
    %108 = vector.broadcast %cst_31 : f32 to vector<2x96xf32>
    %109 = arith.addf %108, %107 : vector<2x96xf32>
    %110 = arith.divf %108, %109 : vector<2x96xf32>
    %111 = vector.extract_strided_slice %110 {offsets = [0, 0], sizes = [2, 32], strides = [1, 1]} : vector<2x96xf32> to vector<2x32xf32>
    %112 = vector.extract_strided_slice %110 {offsets = [0, 32], sizes = [2, 32], strides = [1, 1]} : vector<2x96xf32> to vector<2x32xf32>
    %113 = vector.extract_strided_slice %110 {offsets = [0, 64], sizes = [2, 32], strides = [1, 1]} : vector<2x96xf32> to vector<2x32xf32>
    %114 = vector.extract_strided_slice %104 {offsets = [0, 96], sizes = [2, 32], strides = [1, 1]} : vector<2x128xf32> to vector<2x32xf32>
    %115 = math.tanh %114 : vector<2x32xf32>
    %116 = arith.mulf %111, %98 : vector<2x32xf32>
    %117 = arith.addf %116, %112 : vector<2x32xf32>
    %118 = arith.addf %117, %115 : vector<2x32xf32>
    %119 = math.tanh %118 : vector<2x32xf32>
    %120 = arith.mulf %113, %119 : vector<2x32xf32>
    %121 = vector.extract_strided_slice %55 {offsets = [6, 0], sizes = [2, 128], strides = [1, 1]} : vector<16x128xf32> to vector<2x128xf32>
    %122 = arith.truncf %120 : vector<2x32xf32> to vector<2x32xbf16>
    %cst_32 = arith.constant dense<0.000000e+00> : vector<2x128xf32>
    %123 = tpu.matmul %122, %57, %cst_32 {dimension_numbers = #tpu.dot_dimension_numbers<[1], [0], [0], [1], [0, 0, 1, 1], [], []>} : vector<2x32xbf16>, vector<32x128xbf16>, vector<2x128xf32> -> vector<2x128xf32>
    %124 = arith.addf %123, %121 : vector<2x128xf32>
    %125 = vector.extract_strided_slice %124 {offsets = [0, 0], sizes = [2, 96], strides = [1, 1]} : vector<2x128xf32> to vector<2x96xf32>
    %126 = arith.negf %125 : vector<2x96xf32>
    %127 = math.exp %126 : vector<2x96xf32>
    %cst_33 = arith.constant 1.000000e+00 : f32
    %128 = vector.broadcast %cst_33 : f32 to vector<2x96xf32>
    %129 = arith.addf %128, %127 : vector<2x96xf32>
    %130 = arith.divf %128, %129 : vector<2x96xf32>
    %131 = vector.extract_strided_slice %130 {offsets = [0, 0], sizes = [2, 32], strides = [1, 1]} : vector<2x96xf32> to vector<2x32xf32>
    %132 = vector.extract_strided_slice %130 {offsets = [0, 32], sizes = [2, 32], strides = [1, 1]} : vector<2x96xf32> to vector<2x32xf32>
    %133 = vector.extract_strided_slice %130 {offsets = [0, 64], sizes = [2, 32], strides = [1, 1]} : vector<2x96xf32> to vector<2x32xf32>
    %134 = vector.extract_strided_slice %124 {offsets = [0, 96], sizes = [2, 32], strides = [1, 1]} : vector<2x128xf32> to vector<2x32xf32>
    %135 = math.tanh %134 : vector<2x32xf32>
    %136 = arith.mulf %131, %118 : vector<2x32xf32>
    %137 = arith.addf %136, %132 : vector<2x32xf32>
    %138 = arith.addf %137, %135 : vector<2x32xf32>
    %139 = math.tanh %138 : vector<2x32xf32>
    %140 = arith.mulf %133, %139 : vector<2x32xf32>
    %141 = vector.extract_strided_slice %55 {offsets = [8, 0], sizes = [2, 128], strides = [1, 1]} : vector<16x128xf32> to vector<2x128xf32>
    %142 = arith.truncf %140 : vector<2x32xf32> to vector<2x32xbf16>
    %cst_34 = arith.constant dense<0.000000e+00> : vector<2x128xf32>
    %143 = tpu.matmul %142, %57, %cst_34 {dimension_numbers = #tpu.dot_dimension_numbers<[1], [0], [0], [1], [0, 0, 1, 1], [], []>} : vector<2x32xbf16>, vector<32x128xbf16>, vector<2x128xf32> -> vector<2x128xf32>
    %144 = arith.addf %143, %141 : vector<2x128xf32>
    %145 = vector.extract_strided_slice %144 {offsets = [0, 0], sizes = [2, 96], strides = [1, 1]} : vector<2x128xf32> to vector<2x96xf32>
    %146 = arith.negf %145 : vector<2x96xf32>
    %147 = math.exp %146 : vector<2x96xf32>
    %cst_35 = arith.constant 1.000000e+00 : f32
    %148 = vector.broadcast %cst_35 : f32 to vector<2x96xf32>
    %149 = arith.addf %148, %147 : vector<2x96xf32>
    %150 = arith.divf %148, %149 : vector<2x96xf32>
    %151 = vector.extract_strided_slice %150 {offsets = [0, 0], sizes = [2, 32], strides = [1, 1]} : vector<2x96xf32> to vector<2x32xf32>
    %152 = vector.extract_strided_slice %150 {offsets = [0, 32], sizes = [2, 32], strides = [1, 1]} : vector<2x96xf32> to vector<2x32xf32>
    %153 = vector.extract_strided_slice %150 {offsets = [0, 64], sizes = [2, 32], strides = [1, 1]} : vector<2x96xf32> to vector<2x32xf32>
    %154 = vector.extract_strided_slice %144 {offsets = [0, 96], sizes = [2, 32], strides = [1, 1]} : vector<2x128xf32> to vector<2x32xf32>
    %155 = math.tanh %154 : vector<2x32xf32>
    %156 = arith.mulf %151, %138 : vector<2x32xf32>
    %157 = arith.addf %156, %152 : vector<2x32xf32>
    %158 = arith.addf %157, %155 : vector<2x32xf32>
    %159 = math.tanh %158 : vector<2x32xf32>
    %160 = arith.mulf %153, %159 : vector<2x32xf32>
    %161 = vector.extract_strided_slice %55 {offsets = [10, 0], sizes = [2, 128], strides = [1, 1]} : vector<16x128xf32> to vector<2x128xf32>
    %162 = arith.truncf %160 : vector<2x32xf32> to vector<2x32xbf16>
    %cst_36 = arith.constant dense<0.000000e+00> : vector<2x128xf32>
    %163 = tpu.matmul %162, %57, %cst_36 {dimension_numbers = #tpu.dot_dimension_numbers<[1], [0], [0], [1], [0, 0, 1, 1], [], []>} : vector<2x32xbf16>, vector<32x128xbf16>, vector<2x128xf32> -> vector<2x128xf32>
    %164 = arith.addf %163, %161 : vector<2x128xf32>
    %165 = vector.extract_strided_slice %164 {offsets = [0, 0], sizes = [2, 96], strides = [1, 1]} : vector<2x128xf32> to vector<2x96xf32>
    %166 = arith.negf %165 : vector<2x96xf32>
    %167 = math.exp %166 : vector<2x96xf32>
    %cst_37 = arith.constant 1.000000e+00 : f32
    %168 = vector.broadcast %cst_37 : f32 to vector<2x96xf32>
    %169 = arith.addf %168, %167 : vector<2x96xf32>
    %170 = arith.divf %168, %169 : vector<2x96xf32>
    %171 = vector.extract_strided_slice %170 {offsets = [0, 0], sizes = [2, 32], strides = [1, 1]} : vector<2x96xf32> to vector<2x32xf32>
    %172 = vector.extract_strided_slice %170 {offsets = [0, 32], sizes = [2, 32], strides = [1, 1]} : vector<2x96xf32> to vector<2x32xf32>
    %173 = vector.extract_strided_slice %170 {offsets = [0, 64], sizes = [2, 32], strides = [1, 1]} : vector<2x96xf32> to vector<2x32xf32>
    %174 = vector.extract_strided_slice %164 {offsets = [0, 96], sizes = [2, 32], strides = [1, 1]} : vector<2x128xf32> to vector<2x32xf32>
    %175 = math.tanh %174 : vector<2x32xf32>
    %176 = arith.mulf %171, %158 : vector<2x32xf32>
    %177 = arith.addf %176, %172 : vector<2x32xf32>
    %178 = arith.addf %177, %175 : vector<2x32xf32>
    %179 = math.tanh %178 : vector<2x32xf32>
    %180 = arith.mulf %173, %179 : vector<2x32xf32>
    %181 = vector.extract_strided_slice %55 {offsets = [12, 0], sizes = [2, 128], strides = [1, 1]} : vector<16x128xf32> to vector<2x128xf32>
    %182 = arith.truncf %180 : vector<2x32xf32> to vector<2x32xbf16>
    %cst_38 = arith.constant dense<0.000000e+00> : vector<2x128xf32>
    %183 = tpu.matmul %182, %57, %cst_38 {dimension_numbers = #tpu.dot_dimension_numbers<[1], [0], [0], [1], [0, 0, 1, 1], [], []>} : vector<2x32xbf16>, vector<32x128xbf16>, vector<2x128xf32> -> vector<2x128xf32>
    %184 = arith.addf %183, %181 : vector<2x128xf32>
    %185 = vector.extract_strided_slice %184 {offsets = [0, 0], sizes = [2, 96], strides = [1, 1]} : vector<2x128xf32> to vector<2x96xf32>
    %186 = arith.negf %185 : vector<2x96xf32>
    %187 = math.exp %186 : vector<2x96xf32>
    %cst_39 = arith.constant 1.000000e+00 : f32
    %188 = vector.broadcast %cst_39 : f32 to vector<2x96xf32>
    %189 = arith.addf %188, %187 : vector<2x96xf32>
    %190 = arith.divf %188, %189 : vector<2x96xf32>
    %191 = vector.extract_strided_slice %190 {offsets = [0, 0], sizes = [2, 32], strides = [1, 1]} : vector<2x96xf32> to vector<2x32xf32>
    %192 = vector.extract_strided_slice %190 {offsets = [0, 32], sizes = [2, 32], strides = [1, 1]} : vector<2x96xf32> to vector<2x32xf32>
    %193 = vector.extract_strided_slice %190 {offsets = [0, 64], sizes = [2, 32], strides = [1, 1]} : vector<2x96xf32> to vector<2x32xf32>
    %194 = vector.extract_strided_slice %184 {offsets = [0, 96], sizes = [2, 32], strides = [1, 1]} : vector<2x128xf32> to vector<2x32xf32>
    %195 = math.tanh %194 : vector<2x32xf32>
    %196 = arith.mulf %191, %178 : vector<2x32xf32>
    %197 = arith.addf %196, %192 : vector<2x32xf32>
    %198 = arith.addf %197, %195 : vector<2x32xf32>
    %199 = math.tanh %198 : vector<2x32xf32>
    %200 = arith.mulf %193, %199 : vector<2x32xf32>
    %cst_40 = arith.constant 0.000000e+00 : f32
    %201 = vector.broadcast %cst_40 : f32 to vector<2x32xf32>
    %202 = vector.extract_strided_slice %56 {offsets = [14, 0], sizes = [2, 128], strides = [1, 1]} : vector<16x128xf32> to vector<2x128xf32>
    %203 = arith.truncf %201 : vector<2x32xf32> to vector<2x32xbf16>
    %cst_41 = arith.constant dense<0.000000e+00> : vector<2x128xf32>
    %204 = tpu.matmul %203, %58, %cst_41 {dimension_numbers = #tpu.dot_dimension_numbers<[1], [0], [0], [1], [0, 0, 1, 1], [], []>} : vector<2x32xbf16>, vector<32x128xbf16>, vector<2x128xf32> -> vector<2x128xf32>
    %205 = arith.addf %204, %202 : vector<2x128xf32>
    %206 = vector.extract_strided_slice %205 {offsets = [0, 0], sizes = [2, 96], strides = [1, 1]} : vector<2x128xf32> to vector<2x96xf32>
    %207 = arith.negf %206 : vector<2x96xf32>
    %208 = math.exp %207 : vector<2x96xf32>
    %cst_42 = arith.constant 1.000000e+00 : f32
    %209 = vector.broadcast %cst_42 : f32 to vector<2x96xf32>
    %210 = arith.addf %209, %208 : vector<2x96xf32>
    %211 = arith.divf %209, %210 : vector<2x96xf32>
    %212 = vector.extract_strided_slice %211 {offsets = [0, 0], sizes = [2, 32], strides = [1, 1]} : vector<2x96xf32> to vector<2x32xf32>
    %213 = vector.extract_strided_slice %211 {offsets = [0, 32], sizes = [2, 32], strides = [1, 1]} : vector<2x96xf32> to vector<2x32xf32>
    %214 = vector.extract_strided_slice %211 {offsets = [0, 64], sizes = [2, 32], strides = [1, 1]} : vector<2x96xf32> to vector<2x32xf32>
    %215 = vector.extract_strided_slice %205 {offsets = [0, 96], sizes = [2, 32], strides = [1, 1]} : vector<2x128xf32> to vector<2x32xf32>
    %216 = math.tanh %215 : vector<2x32xf32>
    %217 = arith.mulf %212, %198 : vector<2x32xf32>
    %218 = arith.addf %217, %213 : vector<2x32xf32>
    %219 = arith.addf %218, %216 : vector<2x32xf32>
    %220 = math.tanh %219 : vector<2x32xf32>
    %221 = arith.mulf %214, %220 : vector<2x32xf32>
    %222 = vector.extract_strided_slice %56 {offsets = [12, 0], sizes = [2, 128], strides = [1, 1]} : vector<16x128xf32> to vector<2x128xf32>
    %223 = arith.truncf %221 : vector<2x32xf32> to vector<2x32xbf16>
    %cst_43 = arith.constant dense<0.000000e+00> : vector<2x128xf32>
    %224 = tpu.matmul %223, %58, %cst_43 {dimension_numbers = #tpu.dot_dimension_numbers<[1], [0], [0], [1], [0, 0, 1, 1], [], []>} : vector<2x32xbf16>, vector<32x128xbf16>, vector<2x128xf32> -> vector<2x128xf32>
    %225 = arith.addf %224, %222 : vector<2x128xf32>
    %226 = vector.extract_strided_slice %225 {offsets = [0, 0], sizes = [2, 96], strides = [1, 1]} : vector<2x128xf32> to vector<2x96xf32>
    %227 = arith.negf %226 : vector<2x96xf32>
    %228 = math.exp %227 : vector<2x96xf32>
    %cst_44 = arith.constant 1.000000e+00 : f32
    %229 = vector.broadcast %cst_44 : f32 to vector<2x96xf32>
    %230 = arith.addf %229, %228 : vector<2x96xf32>
    %231 = arith.divf %229, %230 : vector<2x96xf32>
    %232 = vector.extract_strided_slice %231 {offsets = [0, 0], sizes = [2, 32], strides = [1, 1]} : vector<2x96xf32> to vector<2x32xf32>
    %233 = vector.extract_strided_slice %231 {offsets = [0, 32], sizes = [2, 32], strides = [1, 1]} : vector<2x96xf32> to vector<2x32xf32>
    %234 = vector.extract_strided_slice %231 {offsets = [0, 64], sizes = [2, 32], strides = [1, 1]} : vector<2x96xf32> to vector<2x32xf32>
    %235 = vector.extract_strided_slice %225 {offsets = [0, 96], sizes = [2, 32], strides = [1, 1]} : vector<2x128xf32> to vector<2x32xf32>
    %236 = math.tanh %235 : vector<2x32xf32>
    %237 = arith.mulf %232, %219 : vector<2x32xf32>
    %238 = arith.addf %237, %233 : vector<2x32xf32>
    %239 = arith.addf %238, %236 : vector<2x32xf32>
    %240 = math.tanh %239 : vector<2x32xf32>
    %241 = arith.mulf %234, %240 : vector<2x32xf32>
    %242 = vector.extract_strided_slice %56 {offsets = [10, 0], sizes = [2, 128], strides = [1, 1]} : vector<16x128xf32> to vector<2x128xf32>
    %243 = arith.truncf %241 : vector<2x32xf32> to vector<2x32xbf16>
    %cst_45 = arith.constant dense<0.000000e+00> : vector<2x128xf32>
    %244 = tpu.matmul %243, %58, %cst_45 {dimension_numbers = #tpu.dot_dimension_numbers<[1], [0], [0], [1], [0, 0, 1, 1], [], []>} : vector<2x32xbf16>, vector<32x128xbf16>, vector<2x128xf32> -> vector<2x128xf32>
    %245 = arith.addf %244, %242 : vector<2x128xf32>
    %246 = vector.extract_strided_slice %245 {offsets = [0, 0], sizes = [2, 96], strides = [1, 1]} : vector<2x128xf32> to vector<2x96xf32>
    %247 = arith.negf %246 : vector<2x96xf32>
    %248 = math.exp %247 : vector<2x96xf32>
    %cst_46 = arith.constant 1.000000e+00 : f32
    %249 = vector.broadcast %cst_46 : f32 to vector<2x96xf32>
    %250 = arith.addf %249, %248 : vector<2x96xf32>
    %251 = arith.divf %249, %250 : vector<2x96xf32>
    %252 = vector.extract_strided_slice %251 {offsets = [0, 0], sizes = [2, 32], strides = [1, 1]} : vector<2x96xf32> to vector<2x32xf32>
    %253 = vector.extract_strided_slice %251 {offsets = [0, 32], sizes = [2, 32], strides = [1, 1]} : vector<2x96xf32> to vector<2x32xf32>
    %254 = vector.extract_strided_slice %251 {offsets = [0, 64], sizes = [2, 32], strides = [1, 1]} : vector<2x96xf32> to vector<2x32xf32>
    %255 = vector.extract_strided_slice %245 {offsets = [0, 96], sizes = [2, 32], strides = [1, 1]} : vector<2x128xf32> to vector<2x32xf32>
    %256 = math.tanh %255 : vector<2x32xf32>
    %257 = arith.mulf %252, %239 : vector<2x32xf32>
    %258 = arith.addf %257, %253 : vector<2x32xf32>
    %259 = arith.addf %258, %256 : vector<2x32xf32>
    %260 = math.tanh %259 : vector<2x32xf32>
    %261 = arith.mulf %254, %260 : vector<2x32xf32>
    %262 = vector.extract_strided_slice %56 {offsets = [8, 0], sizes = [2, 128], strides = [1, 1]} : vector<16x128xf32> to vector<2x128xf32>
    %263 = arith.truncf %261 : vector<2x32xf32> to vector<2x32xbf16>
    %cst_47 = arith.constant dense<0.000000e+00> : vector<2x128xf32>
    %264 = tpu.matmul %263, %58, %cst_47 {dimension_numbers = #tpu.dot_dimension_numbers<[1], [0], [0], [1], [0, 0, 1, 1], [], []>} : vector<2x32xbf16>, vector<32x128xbf16>, vector<2x128xf32> -> vector<2x128xf32>
    %265 = arith.addf %264, %262 : vector<2x128xf32>
    %266 = vector.extract_strided_slice %265 {offsets = [0, 0], sizes = [2, 96], strides = [1, 1]} : vector<2x128xf32> to vector<2x96xf32>
    %267 = arith.negf %266 : vector<2x96xf32>
    %268 = math.exp %267 : vector<2x96xf32>
    %cst_48 = arith.constant 1.000000e+00 : f32
    %269 = vector.broadcast %cst_48 : f32 to vector<2x96xf32>
    %270 = arith.addf %269, %268 : vector<2x96xf32>
    %271 = arith.divf %269, %270 : vector<2x96xf32>
    %272 = vector.extract_strided_slice %271 {offsets = [0, 0], sizes = [2, 32], strides = [1, 1]} : vector<2x96xf32> to vector<2x32xf32>
    %273 = vector.extract_strided_slice %271 {offsets = [0, 32], sizes = [2, 32], strides = [1, 1]} : vector<2x96xf32> to vector<2x32xf32>
    %274 = vector.extract_strided_slice %271 {offsets = [0, 64], sizes = [2, 32], strides = [1, 1]} : vector<2x96xf32> to vector<2x32xf32>
    %275 = vector.extract_strided_slice %265 {offsets = [0, 96], sizes = [2, 32], strides = [1, 1]} : vector<2x128xf32> to vector<2x32xf32>
    %276 = math.tanh %275 : vector<2x32xf32>
    %277 = arith.mulf %272, %259 : vector<2x32xf32>
    %278 = arith.addf %277, %273 : vector<2x32xf32>
    %279 = arith.addf %278, %276 : vector<2x32xf32>
    %280 = math.tanh %279 : vector<2x32xf32>
    %281 = arith.mulf %274, %280 : vector<2x32xf32>
    %282 = vector.extract_strided_slice %56 {offsets = [6, 0], sizes = [2, 128], strides = [1, 1]} : vector<16x128xf32> to vector<2x128xf32>
    %283 = arith.truncf %281 : vector<2x32xf32> to vector<2x32xbf16>
    %cst_49 = arith.constant dense<0.000000e+00> : vector<2x128xf32>
    %284 = tpu.matmul %283, %58, %cst_49 {dimension_numbers = #tpu.dot_dimension_numbers<[1], [0], [0], [1], [0, 0, 1, 1], [], []>} : vector<2x32xbf16>, vector<32x128xbf16>, vector<2x128xf32> -> vector<2x128xf32>
    %285 = arith.addf %284, %282 : vector<2x128xf32>
    %286 = vector.extract_strided_slice %285 {offsets = [0, 0], sizes = [2, 96], strides = [1, 1]} : vector<2x128xf32> to vector<2x96xf32>
    %287 = arith.negf %286 : vector<2x96xf32>
    %288 = math.exp %287 : vector<2x96xf32>
    %cst_50 = arith.constant 1.000000e+00 : f32
    %289 = vector.broadcast %cst_50 : f32 to vector<2x96xf32>
    %290 = arith.addf %289, %288 : vector<2x96xf32>
    %291 = arith.divf %289, %290 : vector<2x96xf32>
    %292 = vector.extract_strided_slice %291 {offsets = [0, 0], sizes = [2, 32], strides = [1, 1]} : vector<2x96xf32> to vector<2x32xf32>
    %293 = vector.extract_strided_slice %291 {offsets = [0, 32], sizes = [2, 32], strides = [1, 1]} : vector<2x96xf32> to vector<2x32xf32>
    %294 = vector.extract_strided_slice %291 {offsets = [0, 64], sizes = [2, 32], strides = [1, 1]} : vector<2x96xf32> to vector<2x32xf32>
    %295 = vector.extract_strided_slice %285 {offsets = [0, 96], sizes = [2, 32], strides = [1, 1]} : vector<2x128xf32> to vector<2x32xf32>
    %296 = math.tanh %295 : vector<2x32xf32>
    %297 = arith.mulf %292, %279 : vector<2x32xf32>
    %298 = arith.addf %297, %293 : vector<2x32xf32>
    %299 = arith.addf %298, %296 : vector<2x32xf32>
    %300 = math.tanh %299 : vector<2x32xf32>
    %301 = arith.mulf %294, %300 : vector<2x32xf32>
    %302 = vector.extract_strided_slice %56 {offsets = [4, 0], sizes = [2, 128], strides = [1, 1]} : vector<16x128xf32> to vector<2x128xf32>
    %303 = arith.truncf %301 : vector<2x32xf32> to vector<2x32xbf16>
    %cst_51 = arith.constant dense<0.000000e+00> : vector<2x128xf32>
    %304 = tpu.matmul %303, %58, %cst_51 {dimension_numbers = #tpu.dot_dimension_numbers<[1], [0], [0], [1], [0, 0, 1, 1], [], []>} : vector<2x32xbf16>, vector<32x128xbf16>, vector<2x128xf32> -> vector<2x128xf32>
    %305 = arith.addf %304, %302 : vector<2x128xf32>
    %306 = vector.extract_strided_slice %305 {offsets = [0, 0], sizes = [2, 96], strides = [1, 1]} : vector<2x128xf32> to vector<2x96xf32>
    %307 = arith.negf %306 : vector<2x96xf32>
    %308 = math.exp %307 : vector<2x96xf32>
    %cst_52 = arith.constant 1.000000e+00 : f32
    %309 = vector.broadcast %cst_52 : f32 to vector<2x96xf32>
    %310 = arith.addf %309, %308 : vector<2x96xf32>
    %311 = arith.divf %309, %310 : vector<2x96xf32>
    %312 = vector.extract_strided_slice %311 {offsets = [0, 0], sizes = [2, 32], strides = [1, 1]} : vector<2x96xf32> to vector<2x32xf32>
    %313 = vector.extract_strided_slice %311 {offsets = [0, 32], sizes = [2, 32], strides = [1, 1]} : vector<2x96xf32> to vector<2x32xf32>
    %314 = vector.extract_strided_slice %311 {offsets = [0, 64], sizes = [2, 32], strides = [1, 1]} : vector<2x96xf32> to vector<2x32xf32>
    %315 = vector.extract_strided_slice %305 {offsets = [0, 96], sizes = [2, 32], strides = [1, 1]} : vector<2x128xf32> to vector<2x32xf32>
    %316 = math.tanh %315 : vector<2x32xf32>
    %317 = arith.mulf %312, %299 : vector<2x32xf32>
    %318 = arith.addf %317, %313 : vector<2x32xf32>
    %319 = arith.addf %318, %316 : vector<2x32xf32>
    %320 = math.tanh %319 : vector<2x32xf32>
    %321 = arith.mulf %314, %320 : vector<2x32xf32>
    %322 = vector.extract_strided_slice %56 {offsets = [2, 0], sizes = [2, 128], strides = [1, 1]} : vector<16x128xf32> to vector<2x128xf32>
    %323 = arith.truncf %321 : vector<2x32xf32> to vector<2x32xbf16>
    %cst_53 = arith.constant dense<0.000000e+00> : vector<2x128xf32>
    %324 = tpu.matmul %323, %58, %cst_53 {dimension_numbers = #tpu.dot_dimension_numbers<[1], [0], [0], [1], [0, 0, 1, 1], [], []>} : vector<2x32xbf16>, vector<32x128xbf16>, vector<2x128xf32> -> vector<2x128xf32>
    %325 = arith.addf %324, %322 : vector<2x128xf32>
    %326 = vector.extract_strided_slice %325 {offsets = [0, 0], sizes = [2, 96], strides = [1, 1]} : vector<2x128xf32> to vector<2x96xf32>
    %327 = arith.negf %326 : vector<2x96xf32>
    %328 = math.exp %327 : vector<2x96xf32>
    %cst_54 = arith.constant 1.000000e+00 : f32
    %329 = vector.broadcast %cst_54 : f32 to vector<2x96xf32>
    %330 = arith.addf %329, %328 : vector<2x96xf32>
    %331 = arith.divf %329, %330 : vector<2x96xf32>
    %332 = vector.extract_strided_slice %331 {offsets = [0, 0], sizes = [2, 32], strides = [1, 1]} : vector<2x96xf32> to vector<2x32xf32>
    %333 = vector.extract_strided_slice %331 {offsets = [0, 32], sizes = [2, 32], strides = [1, 1]} : vector<2x96xf32> to vector<2x32xf32>
    %334 = vector.extract_strided_slice %331 {offsets = [0, 64], sizes = [2, 32], strides = [1, 1]} : vector<2x96xf32> to vector<2x32xf32>
    %335 = vector.extract_strided_slice %325 {offsets = [0, 96], sizes = [2, 32], strides = [1, 1]} : vector<2x128xf32> to vector<2x32xf32>
    %336 = math.tanh %335 : vector<2x32xf32>
    %337 = arith.mulf %332, %319 : vector<2x32xf32>
    %338 = arith.addf %337, %333 : vector<2x32xf32>
    %339 = arith.addf %338, %336 : vector<2x32xf32>
    %340 = math.tanh %339 : vector<2x32xf32>
    %341 = arith.mulf %334, %340 : vector<2x32xf32>
    %342 = tpu.concatenate %59, %341 in 1 : vector<2x32xf32>, vector<2x32xf32> -> vector<2x64xf32>
    %343 = tpu.concatenate %80, %321 in 1 : vector<2x32xf32>, vector<2x32xf32> -> vector<2x64xf32>
    %344 = tpu.concatenate %100, %301 in 1 : vector<2x32xf32>, vector<2x32xf32> -> vector<2x64xf32>
    %345 = tpu.concatenate %120, %281 in 1 : vector<2x32xf32>, vector<2x32xf32> -> vector<2x64xf32>
    %346 = tpu.concatenate %140, %261 in 1 : vector<2x32xf32>, vector<2x32xf32> -> vector<2x64xf32>
    %347 = tpu.concatenate %160, %241 in 1 : vector<2x32xf32>, vector<2x32xf32> -> vector<2x64xf32>
    %348 = tpu.concatenate %180, %221 in 1 : vector<2x32xf32>, vector<2x32xf32> -> vector<2x64xf32>
    %349 = tpu.concatenate %200, %201 in 1 : vector<2x32xf32>, vector<2x32xf32> -> vector<2x64xf32>
    %350 = tpu.concatenate %342, %343, %344, %345, %346, %347, %348, %349 in 0 : vector<2x64xf32>, vector<2x64xf32>, vector<2x64xf32>, vector<2x64xf32>, vector<2x64xf32>, vector<2x64xf32>, vector<2x64xf32>, vector<2x64xf32> -> vector<16x64xf32>
    %351 = arith.truncf %350 : vector<16x64xf32> to vector<16x64xbf16>
    %c0_55 = arith.constant 0 : index
    %c0_56 = arith.constant 0 : index
    %352 = vector.load %arg6[%c0_55, %c0_56] : memref<64x128xbf16, #tpu.memory_space<vmem>>, vector<64x128xbf16>
    %cst_57 = arith.constant dense<0.000000e+00> : vector<16x128xf32>
    %353 = tpu.matmul %351, %352, %cst_57 {dimension_numbers = #tpu.dot_dimension_numbers<[1], [0], [0], [1], [0, 0, 1, 1], [], []>} : vector<16x64xbf16>, vector<64x128xbf16>, vector<16x128xf32> -> vector<16x128xf32>
    %c0_58 = arith.constant 0 : index
    %c0_59 = arith.constant 0 : index
    %354 = vector.load %arg7[%c0_58, %c0_59] : memref<1x128xf32, #tpu.memory_space<vmem>>, vector<1x128xf32>
    %355 = vector.broadcast %354 : vector<1x128xf32> to vector<16x128xf32>
    %356 = arith.addf %353, %355 : vector<16x128xf32>
    %cst_60 = arith.constant dense<0xFF800000> : vector<16xf32>
    %357 = vector.multi_reduction <maximumf>, %356, %cst_60 [1] : vector<16x128xf32> to vector<16xf32>
    %358 = vector.shape_cast %357 : vector<16xf32> to vector<16x1xf32>
    %359 = vector.broadcast %358 : vector<16x1xf32> to vector<16x128xf32>
    %360 = arith.subf %356, %359 : vector<16x128xf32>
    %361 = math.exp %360 : vector<16x128xf32>
    %cst_61 = arith.constant dense<0.000000e+00> : vector<16xf32>
    %362 = vector.multi_reduction <add>, %361, %cst_61 [1] : vector<16x128xf32> to vector<16xf32>
    %363 = vector.shape_cast %362 : vector<16xf32> to vector<16x1xf32>
    %364 = math.log %363 : vector<16x1xf32>
    %365 = arith.addf %358, %364 : vector<16x1xf32>
    %366 = vector.broadcast %365 : vector<16x1xf32> to vector<16x128xf32>
    %367 = arith.subf %356, %366 : vector<16x128xf32>
    %c0_62 = arith.constant 0 : index
    %c0_63 = arith.constant 0 : index
    %368 = vector.load %arg8[%c0_62, %c0_63] : memref<16x128xf32, #tpu.memory_space<vmem>>, vector<16x128xf32>
    tpu.vector_store %arg8[%c0_62, %c0_63], %367 {strides = array<i32>} : memref<16x128xf32, #tpu.memory_space<vmem>>, vector<16x128xf32>,
    return
  }
}

</mosaic_0001>

<llo_original>
// kernel: bilstm_forward.1
$region0: #{bilstm_forward.1}
  #allocation0 [shape = 'u32[]', space=smem, size = 0x4, offset = 0x4, fixed_abs, tag = 'smem constant byte address 0x4 - core index']
  #allocation1 [shape = 'u32[144,128]{1,0:T(1,128)}', space=vmem, size = 0x12000, scoped, tag = 'internal scratch']
  %s0 = inlined_call_operand.vmem [shape: s32[16], index: 0, kind: input, shape index: {}]
  %s1 = inlined_call_operand.hbm [shape: f32[50,128], index: 1, kind: input, shape index: {}]
  %s2 = inlined_call_operand.hbm [shape: bf16[128,256], index: 2, kind: input, shape index: {}]
  %s3 = inlined_call_operand.vmem [shape: f32[1,256], index: 3, kind: input, shape index: {}]
  %s4 = inlined_call_operand.vmem [shape: bf16[32,128], index: 4, kind: input, shape index: {}]
  %s5 = inlined_call_operand.hbm [shape: bf16[32,128], index: 5, kind: input, shape index: {}]
  %s6 = inlined_call_operand.hbm [shape: bf16[64,128], index: 6, kind: input, shape index: {}]
  %s7 = inlined_call_operand.vmem [shape: f32[1,128], index: 7, kind: input, shape index: {}]
  %s8 = inlined_call_operand.hbm [shape: f32[16,128], index: 8, kind: output, shape index: {}]
  %s9 = sld [smem:[#allocation0]]
  $region62: #{bilstm_forward.1} parent=0
    _
  %s11 = ssub.s32 1, %s9
  %s12 = scalar_select 0, %s11, %s9
  $region1: #{bilstm_forward.1} parent=0
    #allocation2 [shape = 'u8[512]{0}', space=smem, size = 0x200, scoped, tag = 'input window, operand 0, single buffered']
    #allocation3 [shape = 's32[1]{0}', space=sflag, size = 0x4, scoped, tag = 'scoped memory for bilstm_forward.1']
    #allocation4 [shape = 's32[1]{0}', space=sflag, size = 0x4, scoped, tag = 'scoped memory for bilstm_forward.1']
    #allocation5 [shape = 's32[1]{0}', space=sflag, size = 0x4, scoped, tag = 'scoped memory for bilstm_forward.1']
    #allocation6 [shape = 'u8[28672]{0}', space=vmem, size = 0x7000, scoped, tag = 'input window, operand 1, single buffered']
    #allocation7 [shape = 'u8[65536]{0}', space=vmem, size = 0x10000, scoped, tag = 'input window, operand 2, single buffered']
    #allocation8 [shape = 's32[1]{0}', space=sflag, size = 0x4, scoped, tag = 'scoped memory for bilstm_forward.1']
    #allocation9 [shape = 'u8[8192]{0}', space=vmem, size = 0x2000, scoped, tag = 'input window, operand 5, single buffered']
    #allocation10 [shape = 'u8[16384]{0}', space=vmem, size = 0x4000, scoped, tag = 'input window, operand 6, single buffered']
    #allocation11 [shape = 's32[1]{0}', space=sflag, size = 0x4, scoped, tag = 'scoped memory for bilstm_forward.1']
    #allocation12 [shape = 'u8[8192]{0}', space=vmem, size = 0x2000, scoped, tag = 'output window, operand 0, single buffered']
    %13 = vsyncpa [#allocation5], 0
    %14 = vsyncpa [#allocation3], 0
    %15 = vsyncpa [#allocation8], 0
    %16 = vsyncpa [#allocation11], 0
    %17 = vsyncpa [#allocation4], 0
    // Predicated region
    $region2: #{bilstm_forward.1} parent=1 // pred_check
      _
    $region3: #{bilstm_forward.1} parent=1 // pred_check_branch
      %19 = sbr.rel (0) target = $region5
    $region4: #{bilstm_forward.1} parent=1 // pred_region
      %s21 = ssub.s32 16, 16
      %22 = vsyncadd [#allocation5], %s21
      %s24 = sshll.u32 %s0, 4
      %s25 = int_to_ptr.vmem [resolvable:$true] %s24
      %27 = dma.vmem_to_smem %s25, 16, [#allocation2], [#allocation5]
    $region5: #{bilstm_forward.1} parent=1 // pred_fallthru
      _
    // Predicated region
    $region6: #{bilstm_forward.1} parent=1 // pred_check
      _
    $region7: #{bilstm_forward.1} parent=1 // pred_check_branch
      %29 = sbr.rel (0) target = $region9
    $region8: #{bilstm_forward.1} parent=1 // pred_region
      %s31 = ssub.s32 896, 896
      %32 = vsyncadd [#allocation3], %s31
      %s33 = sshll.u32 [#allocation6], 4
      %s34 = int_to_ptr.vmem [resolvable:$true] %s33
      %39 = dma.hbm_to_vmem [thread:$0]  %s1, 896, %s34, [#allocation3], 128, 128, 8
    $region9: #{bilstm_forward.1} parent=1 // pred_fallthru
      _
    // Predicated region
    $region10: #{bilstm_forward.1} parent=1 // pred_check
      _
    $region11: #{bilstm_forward.1} parent=1 // pred_check_branch
      %41 = sbr.rel (0) target = $region13
    $region12: #{bilstm_forward.1} parent=1 // pred_region
      %s43 = ssub.s32 2048, 2048
      %44 = vsyncadd [#allocation8], %s43
      %s45 = sshll.u32 [#allocation7], 4
      %s46 = int_to_ptr.vmem [resolvable:$true] %s45
      %51 = dma.hbm_to_vmem [thread:$0]  %s2, 2048, %s46, [#allocation8], 128, 128, 8
    $region13: #{bilstm_forward.1} parent=1 // pred_fallthru
      _
    // Predicated region
    $region14: #{bilstm_forward.1} parent=1 // pred_check
      _
    $region15: #{bilstm_forward.1} parent=1 // pred_check_branch
      %53 = sbr.rel (0) target = $region17
    $region16: #{bilstm_forward.1} parent=1 // pred_region
      _
    $region17: #{bilstm_forward.1} parent=1 // pred_fallthru
      _
    // Predicated region
    $region18: #{bilstm_forward.1} parent=1 // pred_check
      _
    $region19: #{bilstm_forward.1} parent=1 // pred_check_branch
      %55 = sbr.rel (0) target = $region21
    $region20: #{bilstm_forward.1} parent=1 // pred_region
      _
    $region21: #{bilstm_forward.1} parent=1 // pred_fallthru
      _
    // Predicated region
    $region22: #{bilstm_forward.1} parent=1 // pred_check
      _
    $region23: #{bilstm_forward.1} parent=1 // pred_check_branch
      %57 = sbr.rel (0) target = $region25
    $region24: #{bilstm_forward.1} parent=1 // pred_region
      %s59 = ssub.s32 256, 256
      %60 = vsyncadd [#allocation8], %s59
      %s61 = sshll.u32 [#allocation9], 4
      %s62 = int_to_ptr.vmem [resolvable:$true] %s61
      %67 = dma.hbm_to_vmem [thread:$0]  %s5, 256, %s62, [#allocation8], 64, 64, 4
    $region25: #{bilstm_forward.1} parent=1 // pred_fallthru
      _
    // Predicated region
    $region26: #{bilstm_forward.1} parent=1 // pred_check
      _
    $region27: #{bilstm_forward.1} parent=1 // pred_check_branch
      %69 = sbr.rel (0) target = $region29
    $region28: #{bilstm_forward.1} parent=1 // pred_region
      %s71 = ssub.s32 512, 512
      %72 = vsyncadd [#allocation11], %s71
      %s73 = sshll.u32 [#allocation10], 4
      %s74 = int_to_ptr.vmem [resolvable:$true] %s73
      %79 = dma.hbm_to_vmem [thread:$0]  %s6, 512, %s74, [#allocation11], 64, 64, 4
    $region29: #{bilstm_forward.1} parent=1 // pred_fallthru
      _
    // Predicated region
    $region30: #{bilstm_forward.1} parent=1 // pred_check
      _
    $region31: #{bilstm_forward.1} parent=1 // pred_check_branch
      %81 = sbr.rel (0) target = $region33
    $region32: #{bilstm_forward.1} parent=1 // pred_region
      _
    $region33: #{bilstm_forward.1} parent=1 // pred_fallthru
      _
    // Predicated region
    $region34: #{bilstm_forward.1} parent=1 // pred_check
      _
    $region35: #{bilstm_forward.1} parent=1 // pred_check_branch
      %83 = sbr.rel (0) target = $region37
    $region36: #{bilstm_forward.1} parent=1 // pred_region
      %84 = dma.done [#allocation5], 16
    $region37: #{bilstm_forward.1} parent=1 // pred_fallthru
      _
    // Predicated region
    $region38: #{bilstm_forward.1} parent=1 // pred_check
      _
    $region39: #{bilstm_forward.1} parent=1 // pred_check_branch
      %86 = sbr.rel (0) target = $region41
    $region40: #{bilstm_forward.1} parent=1 // pred_region
      %87 = dma.done [#allocation3], 896
    $region41: #{bilstm_forward.1} parent=1 // pred_fallthru
      _
    // Predicated region
    $region42: #{bilstm_forward.1} parent=1 // pred_check
      _
    $region43: #{bilstm_forward.1} parent=1 // pred_check_branch
      %89 = sbr.rel (0) target = $region45
    $region44: #{bilstm_forward.1} parent=1 // pred_region
      %90 = dma.done [#allocation8], 2048
    $region45: #{bilstm_forward.1} parent=1 // pred_fallthru
      _
    // Predicated region
    $region46: #{bilstm_forward.1} parent=1 // pred_check
      _
    $region47: #{bilstm_forward.1} parent=1 // pred_check_branch
      %92 = sbr.rel (0) target = $region49
    $region48: #{bilstm_forward.1} parent=1 // pred_region
      %93 = dma.done [#allocation8], 256
    $region49: #{bilstm_forward.1} parent=1 // pred_fallthru
      _
    // Predicated region
    $region50: #{bilstm_forward.1} parent=1 // pred_check
      _
    $region51: #{bilstm_forward.1} parent=1 // pred_check_branch
      %95 = sbr.rel (0) target = $region53
    $region52: #{bilstm_forward.1} parent=1 // pred_region
      %96 = dma.done [#allocation11], 512
    $region53: #{bilstm_forward.1} parent=1 // pred_fallthru
      _
    %97 = sfence
    %s99 = sld [smem:[#allocation2]]
    %s100 = scalar_lea.vmem [#allocation6], %s99
    %v101 = vld [vmem:[%s100] sm:$0x1]
    %s102 = sld [smem:[#allocation2 + $0x1]]
    %s103 = scalar_lea.vmem [#allocation6], %s102
    %v104 = vld [vmem:[%s103] sm:$0x1]
    %s105 = sld [smem:[#allocation2 + $0x2]]
    %s106 = scalar_lea.vmem [#allocation6], %s105
    %v107 = vld [vmem:[%s106] sm:$0x1]
    %s108 = sld [smem:[#allocation2 + $0x3]]
    %s109 = scalar_lea.vmem [#allocation6], %s108
    %v110 = vld [vmem:[%s109] sm:$0x1]
    %s111 = sld [smem:[#allocation2 + $0x4]]
    %s112 = scalar_lea.vmem [#allocation6], %s111
    %v113 = vld [vmem:[%s112] sm:$0x1]
    %s114 = sld [smem:[#allocation2 + $0x5]]
    %s115 = scalar_lea.vmem [#allocation6], %s114
    %v116 = vld [vmem:[%s115] sm:$0x1]
    %s117 = sld [smem:[#allocation2 + $0x6]]
    %s118 = scalar_lea.vmem [#allocation6], %s117
    %v119 = vld [vmem:[%s118] sm:$0x1]
    %s120 = sld [smem:[#allocation2 + $0x7]]
    %s121 = scalar_lea.vmem [#allocation6], %s120
    %v122 = vld [vmem:[%s121] sm:$0x1]
    %s123 = sld [smem:[#allocation2 + $0x8]]
    %s124 = scalar_lea.vmem [#allocation6], %s123
    %v125 = vld [vmem:[%s124] sm:$0x1]
    %s126 = sld [smem:[#allocation2 + $0x9]]
    %s127 = scalar_lea.vmem [#allocation6], %s126
    %v128 = vld [vmem:[%s127] sm:$0x1]
    %s129 = sld [smem:[#allocation2 + $0xa]]
    %s130 = scalar_lea.vmem [#allocation6], %s129
    %v131 = vld [vmem:[%s130] sm:$0x1]
    %s132 = sld [smem:[#allocation2 + $0xb]]
    %s133 = scalar_lea.vmem [#allocation6], %s132
    %v134 = vld [vmem:[%s133] sm:$0x1]
    %s135 = sld [smem:[#allocation2 + $0xc]]
    %s136 = scalar_lea.vmem [#allocation6], %s135
    %v137 = vld [vmem:[%s136] sm:$0x1]
    %s138 = sld [smem:[#allocation2 + $0xd]]
    %s139 = scalar_lea.vmem [#allocation6], %s138
    %v140 = vld [vmem:[%s139] sm:$0x1]
    %s141 = sld [smem:[#allocation2 + $0xe]]
    %s142 = scalar_lea.vmem [#allocation6], %s141
    %v143 = vld [vmem:[%s142] sm:$0x1]
    %s144 = sld [smem:[#allocation2 + $0xf]]
    %s145 = scalar_lea.vmem [#allocation6], %s144
    %v146 = vld [vmem:[%s145] sm:$0x1]
    %v148 = vrot.slane %v104, 7
    %v151 = vrot.slane %v107, 6
    %v154 = vrot.slane %v110, 5
    %v157 = vrot.slane %v113, 4
    %v160 = vrot.slane %v116, 3
    %v163 = vrot.slane %v119, 2
    %v166 = vrot.slane %v122, 1
    %v169 = vrot.slane %v128, 7
    %v172 = vrot.slane %v131, 6
    %v175 = vrot.slane %v134, 5
    %v178 = vrot.slane %v137, 4
    %v181 = vrot.slane %v140, 3
    %v184 = vrot.slane %v143, 2
    %v187 = vrot.slane %v146, 1
    %vm189 = vcmask 1040384
    %v190 = vsel %vm189, %v101, %v148
    %vm191 = vcmask 1041408
    %v192 = vsel %vm191, %v190, %v151
    %vm193 = vcmask 1042432
    %v194 = vsel %vm193, %v192, %v154
    %vm195 = vcmask 1043456
    %v196 = vsel %vm195, %v194, %v157
    %vm197 = vcmask 1044480
    %v198 = vsel %vm197, %v196, %v160
    %vm199 = vcmask 1045504
    %v200 = vsel %vm199, %v198, %v163
    %vm201 = vcmask 1046528
    %v202 = vsel %vm201, %v200, %v166
    %v203 = vsel %vm189, %v125, %v169
    %v204 = vsel %vm191, %v203, %v172
    %v205 = vsel %vm193, %v204, %v175
    %v206 = vsel %vm195, %v205, %v178
    %v207 = vsel %vm197, %v206, %v181
    %v208 = vsel %vm199, %v207, %v184
    %v209 = vsel %vm201, %v208, %v187
    %v210 = vpack.c.bf16 %v209, %v202
    %v211 = vld [vmem:[#allocation7] sm:$0xff]
    %v212 = vld [vmem:[#allocation7 + $0x8] sm:$0xff]
    %v213 = vld [vmem:[#allocation7 + $0x10] sm:$0xff]
    %v214 = vld [vmem:[#allocation7 + $0x18] sm:$0xff]
    %v215 = vld [vmem:[#allocation7 + $0x20] sm:$0xff]
    %v216 = vld [vmem:[#allocation7 + $0x28] sm:$0xff]
    %v217 = vld [vmem:[#allocation7 + $0x30] sm:$0xff]
    %v218 = vld [vmem:[#allocation7 + $0x38] sm:$0xff]
    %v219 = vld [vmem:[#allocation7 + $0x40] sm:$0xff]
    %v220 = vld [vmem:[#allocation7 + $0x48] sm:$0xff]
    %v221 = vld [vmem:[#allocation7 + $0x50] sm:$0xff]
    %v222 = vld [vmem:[#allocation7 + $0x58] sm:$0xff]
    %v223 = vld [vmem:[#allocation7 + $0x60] sm:$0xff]
    %v224 = vld [vmem:[#allocation7 + $0x68] sm:$0xff]
    %v225 = vld [vmem:[#allocation7 + $0x70] sm:$0xff]
    %v226 = vld [vmem:[#allocation7 + $0x78] sm:$0xff]
    %v227 = vld [vmem:[%s3] sm:$0x3]
    %v229 = vlaneseq
    %v230 = vshrl.u32 %v229, 7
    %v231 = vsub.s32 0, %v230
    %v232 = vrot.slane %v227, %v231
    %v233 = vlaneseq
    %v234 = vshrl.u32 %v233, 7
    %v235 = vsub.s32 1, %v234
    %v236 = vrot.slane %v227, %v235
    %v255 = vunpack.c.l.b16 %v211
    %v256 = vunpack.c.h.b16 %v211
    %v257 = vunpack.c.l.b16 %v212
    %v258 = vunpack.c.h.b16 %v212
    %v259 = vunpack.c.l.b16 %v213
    %v260 = vunpack.c.h.b16 %v213
    %v261 = vunpack.c.l.b16 %v214
    %v262 = vunpack.c.h.b16 %v214
    %v263 = vunpack.c.l.b16 %v215
    %v264 = vunpack.c.h.b16 %v215
    %v265 = vunpack.c.l.b16 %v216
    %v266 = vunpack.c.h.b16 %v216
    %v267 = vunpack.c.l.b16 %v217
    %v268 = vunpack.c.h.b16 %v217
    %v269 = vunpack.c.l.b16 %v218
    %v270 = vunpack.c.h.b16 %v218
    %v271 = vunpack.c.l.b16 %v219
    %v272 = vunpack.c.h.b16 %v219
    %v273 = vunpack.c.l.b16 %v220
    %v274 = vunpack.c.h.b16 %v220
    %v275 = vunpack.c.l.b16 %v221
    %v276 = vunpack.c.h.b16 %v221
    %v277 = vunpack.c.l.b16 %v222
    %v278 = vunpack.c.h.b16 %v222
    %v279 = vunpack.c.l.b16 %v223
    %v280 = vunpack.c.h.b16 %v223
    %v281 = vunpack.c.l.b16 %v224
    %v282 = vunpack.c.h.b16 %v224
    %v283 = vunpack.c.l.b16 %v225
    %v284 = vunpack.c.h.b16 %v225
    %v285 = vunpack.c.l.b16 %v226
    %v286 = vunpack.c.h.b16 %v226
    %v287 = vpack.c.b16 %v257, %v255
    %v288 = vpack.c.b16 %v258, %v256
    %v289 = vpack.c.b16 %v261, %v259
    %v290 = vpack.c.b16 %v262, %v260
    %v291 = vpack.c.b16 %v265, %v263
    %v292 = vpack.c.b16 %v266, %v264
    %v293 = vpack.c.b16 %v269, %v267
    %v294 = vpack.c.b16 %v270, %v268
    %v295 = vpack.c.b16 %v273, %v271
    %v296 = vpack.c.b16 %v274, %v272
    %v297 = vpack.c.b16 %v277, %v275
    %v298 = vpack.c.b16 %v278, %v276
    %v299 = vpack.c.b16 %v281, %v279
    %v300 = vpack.c.b16 %v282, %v280
    %v301 = vpack.c.b16 %v285, %v283
    %v302 = vpack.c.b16 %v286, %v284
    %319 = vmatprep.subr.bf16.mxu0 %v302
    %320 = vmatpush1.bf16.msra.mxu0 %v301
    %321 = vmatprep.subr.bf16.mxu0 %v300
    %322 = vmatpush1.bf16.msra.mxu0 %v299
    %323 = vmatprep.subr.bf16.mxu0 %v298
    %324 = vmatpush1.bf16.msra.mxu0 %v297
    %325 = vmatprep.subr.bf16.mxu0 %v296
    %326 = vmatpush1.bf16.msra.mxu0 %v295
    %327 = vmatprep.subr.bf16.mxu0 %v294
    %328 = vmatpush1.bf16.msra.mxu0 %v293
    %329 = vmatprep.subr.bf16.mxu0 %v292
    %330 = vmatpush1.bf16.msra.mxu0 %v291
    %331 = vmatprep.subr.bf16.mxu0 %v290
    %332 = vmatpush1.bf16.msra.mxu0 %v289
    %333 = vmatprep.subr.bf16.mxu0 %v288
    %334 = vmatpush1.bf16.msra.mxu0 %v287
    %335 = vmatprep.subr.bf16.mxu0 0
    %336 = vmatpush2.bf16.msra.mxu0 0
    %337 = vmatprep.subr.bf16.mxu0 0
    %338 = vmatpush2.bf16.msra.mxu0 0
    %339 = vmatprep.subr.bf16.mxu0 0
    %340 = vmatpush2.bf16.msra.mxu0 0
    %341 = vmatprep.subr.bf16.mxu0 0
    %342 = vmatpush2.bf16.msra.mxu0 0
    %343 = vmatprep.subr.bf16.mxu0 0
    %344 = vmatpush2.bf16.msra.mxu0 0
    %345 = vmatprep.subr.bf16.mxu0 0
    %346 = vmatpush2.bf16.msra.mxu0 0
    %347 = vmatprep.subr.bf16.mxu0 0
    %348 = vmatpush2.bf16.msra.mxu0 0
    %349 = vmatprep.subr.bf16.mxu0 0
    %350 = vmatpush2.bf16.msra.mxu0 0
    %351 = vmatprep.mubr.bf16.mxu0 0
    %352 = vmatmul.mubr.bf16.gmra.mxu0 %v210
    %v353 = vpop.f32.mrf.mxu0
    %v354 = vadd.f32 %v232, %v353
    %v355 = vpop.f32.mrf.mxu0
    %v356 = vadd.f32 %v236, %v355
    %v357 = vpop.f32.mrf.mxu0
    %v358 = vadd.f32 %v232, %v357
    %v359 = vpop.f32.mrf.mxu0
    %v360 = vadd.f32 %v236, %v359
    %361 = vdwg.mxu0
    %v362 = vld [vmem:[%s4] sm:$0xf]
    %v363 = vld [vmem:[%s4 + $0x4] sm:$0xf]
    %v364 = vld [vmem:[%s4 + $0x8] sm:$0xf]
    %v365 = vld [vmem:[%s4 + $0xc] sm:$0xf]
    %v366 = vld [vmem:[#allocation9] sm:$0xf]
    %v367 = vld [vmem:[#allocation9 + $0x4] sm:$0xf]
    %v368 = vld [vmem:[#allocation9 + $0x8] sm:$0xf]
    %v369 = vld [vmem:[#allocation9 + $0xc] sm:$0xf]
    %v374 = vunpack.c.l.b16 %v362
    %v375 = vunpack.c.l.b16 %v363
    %v376 = vunpack.c.l.b16 %v364
    %v377 = vunpack.c.l.b16 %v365
    %v378 = vpack.c.b16 %v375, %v374
    %v379 = vpack.c.b16 %v377, %v376
    %vm382 = vcmask 261120
    %v384 = vsel %vm382, 0, 0
    %386 = vmatprep.subr.bf16.mxu0 0
    %387 = vmatpush1.bf16.msra.mxu0 0
    %388 = vmatprep.subr.bf16.mxu0 0
    %389 = vmatpush1.bf16.msra.mxu0 0
    %390 = vmatprep.subr.bf16.mxu0 0
    %391 = vmatpush1.bf16.msra.mxu0 0
    %392 = vmatprep.subr.bf16.mxu0 0
    %393 = vmatpush1.bf16.msra.mxu0 0
    %394 = vmatprep.subr.bf16.mxu0 0
    %395 = vmatpush1.bf16.msra.mxu0 0
    %396 = vmatprep.subr.bf16.mxu0 0
    %397 = vmatpush1.bf16.msra.mxu0 0
    %398 = vmatprep.subr.bf16.mxu0 0
    %399 = vmatpush1.bf16.msra.mxu0 %v379
    %400 = vmatprep.subr.bf16.mxu0 0
    %401 = vmatpush1.bf16.msra.mxu0 %v378
    %402 = vmatprep.subr.bf16.mxu0 0
    %403 = vmatpush2.bf16.msra.mxu0 0
    %404 = vmatprep.subr.bf16.mxu0 0
    %405 = vmatpush2.bf16.msra.mxu0 0
    %406 = vmatprep.subr.bf16.mxu0 0
    %407 = vmatpush2.bf16.msra.mxu0 0
    %408 = vmatprep.subr.bf16.mxu0 0
    %409 = vmatpush2.bf16.msra.mxu0 0
    %410 = vmatprep.subr.bf16.mxu0 0
    %411 = vmatpush2.bf16.msra.mxu0 0
    %412 = vmatprep.subr.bf16.mxu0 0
    %413 = vmatpush2.bf16.msra.mxu0 0
    %414 = vmatprep.subr.bf16.mxu0 0
    %415 = vmatpush2.bf16.msra.mxu0 0
    %416 = vmatprep.subr.bf16.mxu0 0
    %417 = vmatpush2.bf16.msra.mxu0 0
    %418 = vmatprep.mubr.bf16.mxu0 0
    %419 = vmatmul.mubr.bf16.gmra.mxu0 %v384
    %v420 = vpop.f32.mrf.mxu0
    %v421 = vadd.f32 %v354, %v420
    %v422 = vpop.f32.mrf.mxu0
    %v423 = vpop.f32.mrf.mxu0
    %v424 = vpop.f32.mrf.mxu0
    %425 = vdwg.mxu0
    %v426 = vxor.u32 %v421, 2147483648
    %v427 = vmul.f32 %v426, 1.442695
    %v428 = vpow.pop %v427
    %v429 = vadd.f32 %v428, 1.0
    %v430 = vrcp.pop %v429
    %v431 = vmul.f32 1.0, %v430
    %v432 = vtanh.pop %v421
    %v433 = vmul.f32 %v431, 0.0
    %435 = vrot.lane.b32.xlu0 %v431, 96
    %v436 = vpop.permute.xlu0 %435
    %v438 = vadd.f32 %v433, %v436
    %440 = vrot.lane.b32.xlu0 %v432, 32
    %v441 = vpop.permute.xlu0 %440
    %v443 = vadd.f32 %v438, %v441
    %v444 = vtanh.pop %v443
    %446 = vrot.lane.b32.xlu0 %v444, 64
    %v447 = vpop.permute.xlu0 %446
    %v449 = vmul.f32 %v431, %v447
    %v450 = vpack.c.bf16 %v449, %v449
    %452 = vrot.lane.b32.xlu0 %v450, 64
    %v453 = vpop.permute.xlu0 %452
    %v455 = vrot.slane %v354, 2
    %v458 = vsel %vm382, %v453, 0
    %460 = vmatprep.subr.bf16.mxu0 0
    %461 = vmatpush1.bf16.msra.mxu0 0
    %462 = vmatprep.subr.bf16.mxu0 0
    %463 = vmatpush1.bf16.msra.mxu0 0
    %464 = vmatprep.subr.bf16.mxu0 0
    %465 = vmatpush1.bf16.msra.mxu0 0
    %466 = vmatprep.subr.bf16.mxu0 0
    %467 = vmatpush1.bf16.msra.mxu0 0
    %468 = vmatprep.subr.bf16.mxu0 0
    %469 = vmatpush1.bf16.msra.mxu0 0
    %470 = vmatprep.subr.bf16.mxu0 0
    %471 = vmatpush1.bf16.msra.mxu0 0
    %472 = vmatprep.subr.bf16.mxu0 0
    %473 = vmatpush1.bf16.msra.mxu0 %v379
    %474 = vmatprep.subr.bf16.mxu0 0
    %475 = vmatpush1.bf16.msra.mxu0 %v378
    %476 = vmatprep.subr.bf16.mxu0 0
    %477 = vmatpush2.bf16.msra.mxu0 0
    %478 = vmatprep.subr.bf16.mxu0 0
    %479 = vmatpush2.bf16.msra.mxu0 0
    %480 = vmatprep.subr.bf16.mxu0 0
    %481 = vmatpush2.bf16.msra.mxu0 0
    %482 = vmatprep.subr.bf16.mxu0 0
    %483 = vmatpush2.bf16.msra.mxu0 0
    %484 = vmatprep.subr.bf16.mxu0 0
    %485 = vmatpush2.bf16.msra.mxu0 0
    %486 = vmatprep.subr.bf16.mxu0 0
    %487 = vmatpush2.bf16.msra.mxu0 0
    %488 = vmatprep.subr.bf16.mxu0 0
    %489 = vmatpush2.bf16.msra.mxu0 0
    %490 = vmatprep.subr.bf16.mxu0 0
    %491 = vmatpush2.bf16.msra.mxu0 0
    %492 = vmatprep.mubr.bf16.mxu0 0
    %493 = vmatmul.mubr.bf16.gmra.mxu0 %v458
    %v494 = vpop.f32.mrf.mxu0
    %v495 = vadd.f32 %v455, %v494
    %v496 = vpop.f32.mrf.mxu0
    %v497 = vpop.f32.mrf.mxu0
    %v498 = vpop.f32.mrf.mxu0
    %499 = vdwg.mxu0
    %v500 = vxor.u32 %v495, 2147483648
    %v501 = vmul.f32 %v500, 1.442695
    %v502 = vpow.pop %v501
    %v503 = vadd.f32 %v502, 1.0
    %v504 = vrcp.pop %v503
    %v505 = vmul.f32 1.0, %v504
    %v506 = vtanh.pop %v495
    %v507 = vmul.f32 %v505, %v443
    %509 = vrot.lane.b32.xlu0 %v505, 96
    %v510 = vpop.permute.xlu0 %509
    %v512 = vadd.f32 %v507, %v510
    %514 = vrot.lane.b32.xlu0 %v506, 32
    %v515 = vpop.permute.xlu0 %514
    %v517 = vadd.f32 %v512, %v515
    %v518 = vtanh.pop %v517
    %520 = vrot.lane.b32.xlu0 %v518, 64
    %v521 = vpop.permute.xlu0 %520
    %v523 = vmul.f32 %v505, %v521
    %v524 = vpack.c.bf16 %v523, %v523
    %526 = vrot.lane.b32.xlu0 %v524, 64
    %v527 = vpop.permute.xlu0 %526
    %v528 = vrot.slane %v354, 4
    %v531 = vsel %vm382, %v527, 0
    %533 = vmatprep.subr.bf16.mxu0 0
    %534 = vmatpush1.bf16.msra.mxu0 0
    %535 = vmatprep.subr.bf16.mxu0 0
    %536 = vmatpush1.bf16.msra.mxu0 0
    %537 = vmatprep.subr.bf16.mxu0 0
    %538 = vmatpush1.bf16.msra.mxu0 0
    %539 = vmatprep.subr.bf16.mxu0 0
    %540 = vmatpush1.bf16.msra.mxu0 0
    %541 = vmatprep.subr.bf16.mxu0 0
    %542 = vmatpush1.bf16.msra.mxu0 0
    %543 = vmatprep.subr.bf16.mxu0 0
    %544 = vmatpush1.bf16.msra.mxu0 0
    %545 = vmatprep.subr.bf16.mxu0 0
    %546 = vmatpush1.bf16.msra.mxu0 %v379
    %547 = vmatprep.subr.bf16.mxu0 0
    %548 = vmatpush1.bf16.msra.mxu0 %v378
    %549 = vmatprep.subr.bf16.mxu0 0
    %550 = vmatpush2.bf16.msra.mxu0 0
    %551 = vmatprep.subr.bf16.mxu0 0
    %552 = vmatpush2.bf16.msra.mxu0 0
    %553 = vmatprep.subr.bf16.mxu0 0
    %554 = vmatpush2.bf16.msra.mxu0 0
    %555 = vmatprep.subr.bf16.mxu0 0
    %556 = vmatpush2.bf16.msra.mxu0 0
    %557 = vmatprep.subr.bf16.mxu0 0
    %558 = vmatpush2.bf16.msra.mxu0 0
    %559 = vmatprep.subr.bf16.mxu0 0
    %560 = vmatpush2.bf16.msra.mxu0 0
    %561 = vmatprep.subr.bf16.mxu0 0
    %562 = vmatpush2.bf16.msra.mxu0 0
    %563 = vmatprep.subr.bf16.mxu0 0
    %564 = vmatpush2.bf16.msra.mxu0 0
    %565 = vmatprep.mubr.bf16.mxu0 0
    %566 = vmatmul.mubr.bf16.gmra.mxu0 %v531
    %v567 = vpop.f32.mrf.mxu0
    %v568 = vadd.f32 %v528, %v567
    %v569 = vpop.f32.mrf.mxu0
    %v570 = vpop.f32.mrf.mxu0
    %v571 = vpop.f32.mrf.mxu0
    %572 = vdwg.mxu0
    %v573 = vxor.u32 %v568, 2147483648
    %v574 = vmul.f32 %v573, 1.442695
    %v575 = vpow.pop %v574
    %v576 = vadd.f32 %v575, 1.0
    %v577 = vrcp.pop %v576
    %v578 = vmul.f32 1.0, %v577
    %v579 = vtanh.pop %v568
    %v580 = vmul.f32 %v578, %v517
    %582 = vrot.lane.b32.xlu0 %v578, 96
    %v583 = vpop.permute.xlu0 %582
    %v585 = vadd.f32 %v580, %v583
    %587 = vrot.lane.b32.xlu0 %v579, 32
    %v588 = vpop.permute.xlu0 %587
    %v590 = vadd.f32 %v585, %v588
    %v591 = vtanh.pop %v590
    %593 = vrot.lane.b32.xlu0 %v591, 64
    %v594 = vpop.permute.xlu0 %593
    %v596 = vmul.f32 %v578, %v594
    %v597 = vpack.c.bf16 %v596, %v596
    %599 = vrot.lane.b32.xlu0 %v597, 64
    %v600 = vpop.permute.xlu0 %599
    %v601 = vrot.slane %v354, 6
    %v604 = vsel %vm382, %v600, 0
    %606 = vmatprep.subr.bf16.mxu0 0
    %607 = vmatpush1.bf16.msra.mxu0 0
    %608 = vmatprep.subr.bf16.mxu0 0
    %609 = vmatpush1.bf16.msra.mxu0 0
    %610 = vmatprep.subr.bf16.mxu0 0
    %611 = vmatpush1.bf16.msra.mxu0 0
    %612 = vmatprep.subr.bf16.mxu0 0
    %613 = vmatpush1.bf16.msra.mxu0 0
    %614 = vmatprep.subr.bf16.mxu0 0
    %615 = vmatpush1.bf16.msra.mxu0 0
    %616 = vmatprep.subr.bf16.mxu0 0
    %617 = vmatpush1.bf16.msra.mxu0 0
    %618 = vmatprep.subr.bf16.mxu0 0
    %619 = vmatpush1.bf16.msra.mxu0 %v379
    %620 = vmatprep.subr.bf16.mxu0 0
    %621 = vmatpush1.bf16.msra.mxu0 %v378
    %622 = vmatprep.subr.bf16.mxu0 0
    %623 = vmatpush2.bf16.msra.mxu0 0
    %624 = vmatprep.subr.bf16.mxu0 0
    %625 = vmatpush2.bf16.msra.mxu0 0
    %626 = vmatprep.subr.bf16.mxu0 0
    %627 = vmatpush2.bf16.msra.mxu0 0
    %628 = vmatprep.subr.bf16.mxu0 0
    %629 = vmatpush2.bf16.msra.mxu0 0
    %630 = vmatprep.subr.bf16.mxu0 0
    %631 = vmatpush2.bf16.msra.mxu0 0
    %632 = vmatprep.subr.bf16.mxu0 0
    %633 = vmatpush2.bf16.msra.mxu0 0
    %634 = vmatprep.subr.bf16.mxu0 0
    %635 = vmatpush2.bf16.msra.mxu0 0
    %636 = vmatprep.subr.bf16.mxu0 0
    %637 = vmatpush2.bf16.msra.mxu0 0
    %638 = vmatprep.mubr.bf16.mxu0 0
    %639 = vmatmul.mubr.bf16.gmra.mxu0 %v604
    %v640 = vpop.f32.mrf.mxu0
    %v641 = vadd.f32 %v601, %v640
    %v642 = vpop.f32.mrf.mxu0
    %v643 = vpop.f32.mrf.mxu0
    %v644 = vpop.f32.mrf.mxu0
    %645 = vdwg.mxu0
    %v646 = vxor.u32 %v641, 2147483648
    %v647 = vmul.f32 %v646, 1.442695
    %v648 = vpow.pop %v647
    %v649 = vadd.f32 %v648, 1.0
    %v650 = vrcp.pop %v649
    %v651 = vmul.f32 1.0, %v650
    %v652 = vtanh.pop %v641
    %v653 = vmul.f32 %v651, %v590
    %655 = vrot.lane.b32.xlu0 %v651, 96
    %v656 = vpop.permute.xlu0 %655
    %v658 = vadd.f32 %v653, %v656
    %660 = vrot.lane.b32.xlu0 %v652, 32
    %v661 = vpop.permute.xlu0 %660
    %v663 = vadd.f32 %v658, %v661
    %v664 = vtanh.pop %v663
    %666 = vrot.lane.b32.xlu0 %v664, 64
    %v667 = vpop.permute.xlu0 %666
    %v669 = vmul.f32 %v651, %v667
    %v670 = vpack.c.bf16 %v669, %v669
    %672 = vrot.lane.b32.xlu0 %v670, 64
    %v673 = vpop.permute.xlu0 %672
    %v675 = vsel %vm382, %v673, 0
    %677 = vmatprep.subr.bf16.mxu0 0
    %678 = vmatpush1.bf16.msra.mxu0 0
    %679 = vmatprep.subr.bf16.mxu0 0
    %680 = vmatpush1.bf16.msra.mxu0 0
    %681 = vmatprep.subr.bf16.mxu0 0
    %682 = vmatpush1.bf16.msra.mxu0 0
    %683 = vmatprep.subr.bf16.mxu0 0
    %684 = vmatpush1.bf16.msra.mxu0 0
    %685 = vmatprep.subr.bf16.mxu0 0
    %686 = vmatpush1.bf16.msra.mxu0 0
    %687 = vmatprep.subr.bf16.mxu0 0
    %688 = vmatpush1.bf16.msra.mxu0 0
    %689 = vmatprep.subr.bf16.mxu0 0
    %690 = vmatpush1.bf16.msra.mxu0 %v379
    %691 = vmatprep.subr.bf16.mxu0 0
    %692 = vmatpush1.bf16.msra.mxu0 %v378
    %693 = vmatprep.subr.bf16.mxu0 0
    %694 = vmatpush2.bf16.msra.mxu0 0
    %695 = vmatprep.subr.bf16.mxu0 0
    %696 = vmatpush2.bf16.msra.mxu0 0
    %697 = vmatprep.subr.bf16.mxu0 0
    %698 = vmatpush2.bf16.msra.mxu0 0
    %699 = vmatprep.subr.bf16.mxu0 0
    %700 = vmatpush2.bf16.msra.mxu0 0
    %701 = vmatprep.subr.bf16.mxu0 0
    %702 = vmatpush2.bf16.msra.mxu0 0
    %703 = vmatprep.subr.bf16.mxu0 0
    %704 = vmatpush2.bf16.msra.mxu0 0
    %705 = vmatprep.subr.bf16.mxu0 0
    %706 = vmatpush2.bf16.msra.mxu0 0
    %707 = vmatprep.subr.bf16.mxu0 0
    %708 = vmatpush2.bf16.msra.mxu0 0
    %709 = vmatprep.mubr.bf16.mxu0 0
    %710 = vmatmul.mubr.bf16.gmra.mxu0 %v675
    %v711 = vpop.f32.mrf.mxu0
    %v712 = vadd.f32 %v358, %v711
    %v713 = vpop.f32.mrf.mxu0
    %v714 = vpop.f32.mrf.mxu0
    %v715 = vpop.f32.mrf.mxu0
    %716 = vdwg.mxu0
    %v717 = vxor.u32 %v712, 2147483648
    %v718 = vmul.f32 %v717, 1.442695
    %v719 = vpow.pop %v718
    %v720 = vadd.f32 %v719, 1.0
    %v721 = vrcp.pop %v720
    %v722 = vmul.f32 1.0, %v721
    %v723 = vtanh.pop %v712
    %v724 = vmul.f32 %v722, %v663
    %726 = vrot.lane.b32.xlu0 %v722, 96
    %v727 = vpop.permute.xlu0 %726
    %v729 = vadd.f32 %v724, %v727
    %731 = vrot.lane.b32.xlu0 %v723, 32
    %v732 = vpop.permute.xlu0 %731
    %v734 = vadd.f32 %v729, %v732
    %v735 = vtanh.pop %v734
    %737 = vrot.lane.b32.xlu0 %v735, 64
    %v738 = vpop.permute.xlu0 %737
    %v740 = vmul.f32 %v722, %v738
    %v741 = vpack.c.bf16 %v740, %v740
    %743 = vrot.lane.b32.xlu0 %v741, 64
    %v744 = vpop.permute.xlu0 %743
    %v746 = vrot.slane %v358, 2
    %v749 = vsel %vm382, %v744, 0
    %751 = vmatprep.subr.bf16.mxu0 0
    %752 = vmatpush1.bf16.msra.mxu0 0
    %753 = vmatprep.subr.bf16.mxu0 0
    %754 = vmatpush1.bf16.msra.mxu0 0
    %755 = vmatprep.subr.bf16.mxu0 0
    %756 = vmatpush1.bf16.msra.mxu0 0
    %757 = vmatprep.subr.bf16.mxu0 0
    %758 = vmatpush1.bf16.msra.mxu0 0
    %759 = vmatprep.subr.bf16.mxu0 0
    %760 = vmatpush1.bf16.msra.mxu0 0
    %761 = vmatprep.subr.bf16.mxu0 0
    %762 = vmatpush1.bf16.msra.mxu0 0
    %763 = vmatprep.subr.bf16.mxu0 0
    %764 = vmatpush1.bf16.msra.mxu0 %v379
    %765 = vmatprep.subr.bf16.mxu0 0
    %766 = vmatpush1.bf16.msra.mxu0 %v378
    %767 = vmatprep.subr.bf16.mxu0 0
    %768 = vmatpush2.bf16.msra.mxu0 0
    %769 = vmatprep.subr.bf16.mxu0 0
    %770 = vmatpush2.bf16.msra.mxu0 0
    %771 = vmatprep.subr.bf16.mxu0 0
    %772 = vmatpush2.bf16.msra.mxu0 0
    %773 = vmatprep.subr.bf16.mxu0 0
    %774 = vmatpush2.bf16.msra.mxu0 0
    %775 = vmatprep.subr.bf16.mxu0 0
    %776 = vmatpush2.bf16.msra.mxu0 0
    %777 = vmatprep.subr.bf16.mxu0 0
    %778 = vmatpush2.bf16.msra.mxu0 0
    %779 = vmatprep.subr.bf16.mxu0 0
    %780 = vmatpush2.bf16.msra.mxu0 0
    %781 = vmatprep.subr.bf16.mxu0 0
    %782 = vmatpush2.bf16.msra.mxu0 0
    %783 = vmatprep.mubr.bf16.mxu0 0
    %784 = vmatmul.mubr.bf16.gmra.mxu0 %v749
    %v785 = vpop.f32.mrf.mxu0
    %v786 = vadd.f32 %v746, %v785
    %v787 = vpop.f32.mrf.mxu0
    %v788 = vpop.f32.mrf.mxu0
    %v789 = vpop.f32.mrf.mxu0
    %790 = vdwg.mxu0
    %v791 = vxor.u32 %v786, 2147483648
    %v792 = vmul.f32 %v791, 1.442695
    %v793 = vpow.pop %v792
    %v794 = vadd.f32 %v793, 1.0
    %v795 = vrcp.pop %v794
    %v796 = vmul.f32 1.0, %v795
    %v797 = vtanh.pop %v786
    %v798 = vmul.f32 %v796, %v734
    %800 = vrot.lane.b32.xlu0 %v796, 96
    %v801 = vpop.permute.xlu0 %800
    %v803 = vadd.f32 %v798, %v801
    %805 = vrot.lane.b32.xlu0 %v797, 32
    %v806 = vpop.permute.xlu0 %805
    %v808 = vadd.f32 %v803, %v806
    %v809 = vtanh.pop %v808
    %811 = vrot.lane.b32.xlu0 %v809, 64
    %v812 = vpop.permute.xlu0 %811
    %v814 = vmul.f32 %v796, %v812
    %v815 = vpack.c.bf16 %v814, %v814
    %817 = vrot.lane.b32.xlu0 %v815, 64
    %v818 = vpop.permute.xlu0 %817
    %v819 = vrot.slane %v358, 4
    %v822 = vsel %vm382, %v818, 0
    %824 = vmatprep.subr.bf16.mxu0 0
    %825 = vmatpush1.bf16.msra.mxu0 0
    %826 = vmatprep.subr.bf16.mxu0 0
    %827 = vmatpush1.bf16.msra.mxu0 0
    %828 = vmatprep.subr.bf16.mxu0 0
    %829 = vmatpush1.bf16.msra.mxu0 0
    %830 = vmatprep.subr.bf16.mxu0 0
    %831 = vmatpush1.bf16.msra.mxu0 0
    %832 = vmatprep.subr.bf16.mxu0 0
    %833 = vmatpush1.bf16.msra.mxu0 0
    %834 = vmatprep.subr.bf16.mxu0 0
    %835 = vmatpush1.bf16.msra.mxu0 0
    %836 = vmatprep.subr.bf16.mxu0 0
    %837 = vmatpush1.bf16.msra.mxu0 %v379
    %838 = vmatprep.subr.bf16.mxu0 0
    %839 = vmatpush1.bf16.msra.mxu0 %v378
    %840 = vmatprep.subr.bf16.mxu0 0
    %841 = vmatpush2.bf16.msra.mxu0 0
    %842 = vmatprep.subr.bf16.mxu0 0
    %843 = vmatpush2.bf16.msra.mxu0 0
    %844 = vmatprep.subr.bf16.mxu0 0
    %845 = vmatpush2.bf16.msra.mxu0 0
    %846 = vmatprep.subr.bf16.mxu0 0
    %847 = vmatpush2.bf16.msra.mxu0 0
    %848 = vmatprep.subr.bf16.mxu0 0
    %849 = vmatpush2.bf16.msra.mxu0 0
    %850 = vmatprep.subr.bf16.mxu0 0
    %851 = vmatpush2.bf16.msra.mxu0 0
    %852 = vmatprep.subr.bf16.mxu0 0
    %853 = vmatpush2.bf16.msra.mxu0 0
    %854 = vmatprep.subr.bf16.mxu0 0
    %855 = vmatpush2.bf16.msra.mxu0 0
    %856 = vmatprep.mubr.bf16.mxu0 0
    %857 = vmatmul.mubr.bf16.gmra.mxu0 %v822
    %v858 = vpop.f32.mrf.mxu0
    %v859 = vadd.f32 %v819, %v858
    %v860 = vpop.f32.mrf.mxu0
    %v861 = vpop.f32.mrf.mxu0
    %v862 = vpop.f32.mrf.mxu0
    %863 = vdwg.mxu0
    %v864 = vxor.u32 %v859, 2147483648
    %v865 = vmul.f32 %v864, 1.442695
    %v866 = vpow.pop %v865
    %v867 = vadd.f32 %v866, 1.0
    %v868 = vrcp.pop %v867
    %v869 = vmul.f32 1.0, %v868
    %v870 = vtanh.pop %v859
    %v871 = vmul.f32 %v869, %v808
    %873 = vrot.lane.b32.xlu0 %v869, 96
    %v874 = vpop.permute.xlu0 %873
    %v876 = vadd.f32 %v871, %v874
    %878 = vrot.lane.b32.xlu0 %v870, 32
    %v879 = vpop.permute.xlu0 %878
    %v881 = vadd.f32 %v876, %v879
    %v882 = vtanh.pop %v881
    %884 = vrot.lane.b32.xlu0 %v882, 64
    %v885 = vpop.permute.xlu0 %884
    %v887 = vmul.f32 %v869, %v885
    %v892 = vunpack.c.l.b16 %v366
    %v893 = vunpack.c.l.b16 %v367
    %v894 = vunpack.c.l.b16 %v368
    %v895 = vunpack.c.l.b16 %v369
    %v896 = vpack.c.b16 %v893, %v892
    %v897 = vpack.c.b16 %v895, %v894
    %v901 = vrot.slane %v360, 6
    %903 = vmatprep.subr.bf16.mxu0 0
    %904 = vmatpush1.bf16.msra.mxu0 0
    %905 = vmatprep.subr.bf16.mxu0 0
    %906 = vmatpush1.bf16.msra.mxu0 0
    %907 = vmatprep.subr.bf16.mxu0 0
    %908 = vmatpush1.bf16.msra.mxu0 0
    %909 = vmatprep.subr.bf16.mxu0 0
    %910 = vmatpush1.bf16.msra.mxu0 0
    %911 = vmatprep.subr.bf16.mxu0 0
    %912 = vmatpush1.bf16.msra.mxu0 0
    %913 = vmatprep.subr.bf16.mxu0 0
    %914 = vmatpush1.bf16.msra.mxu0 0
    %915 = vmatprep.subr.bf16.mxu0 0
    %916 = vmatpush1.bf16.msra.mxu0 %v897
    %917 = vmatprep.subr.bf16.mxu0 0
    %918 = vmatpush1.bf16.msra.mxu0 %v896
    %919 = vmatprep.subr.bf16.mxu0 0
    %920 = vmatpush2.bf16.msra.mxu0 0
    %921 = vmatprep.subr.bf16.mxu0 0
    %922 = vmatpush2.bf16.msra.mxu0 0
    %923 = vmatprep.subr.bf16.mxu0 0
    %924 = vmatpush2.bf16.msra.mxu0 0
    %925 = vmatprep.subr.bf16.mxu0 0
    %926 = vmatpush2.bf16.msra.mxu0 0
    %927 = vmatprep.subr.bf16.mxu0 0
    %928 = vmatpush2.bf16.msra.mxu0 0
    %929 = vmatprep.subr.bf16.mxu0 0
    %930 = vmatpush2.bf16.msra.mxu0 0
    %931 = vmatprep.subr.bf16.mxu0 0
    %932 = vmatpush2.bf16.msra.mxu0 0
    %933 = vmatprep.subr.bf16.mxu0 0
    %934 = vmatpush2.bf16.msra.mxu0 0
    %935 = vmatprep.mubr.bf16.mxu0 0
    %936 = vmatmul.mubr.bf16.gmra.mxu0 %v384
    %v937 = vpop.f32.mrf.mxu0
    %v938 = vadd.f32 %v901, %v937
    %v939 = vpop.f32.mrf.mxu0
    %v940 = vpop.f32.mrf.mxu0
    %v941 = vpop.f32.mrf.mxu0
    %942 = vdwg.mxu0
    %v943 = vxor.u32 %v938, 2147483648
    %v944 = vmul.f32 %v943, 1.442695
    %v945 = vpow.pop %v944
    %v946 = vadd.f32 %v945, 1.0
    %v947 = vrcp.pop %v946
    %v948 = vmul.f32 1.0, %v947
    %v949 = vtanh.pop %v938
    %v950 = vmul.f32 %v948, %v881
    %952 = vrot.lane.b32.xlu0 %v948, 96
    %v953 = vpop.permute.xlu0 %952
    %v955 = vadd.f32 %v950, %v953
    %957 = vrot.lane.b32.xlu0 %v949, 32
    %v958 = vpop.permute.xlu0 %957
    %v960 = vadd.f32 %v955, %v958
    %v961 = vtanh.pop %v960
    %963 = vrot.lane.b32.xlu0 %v961, 64
    %v964 = vpop.permute.xlu0 %963
    %v966 = vmul.f32 %v948, %v964
    %v967 = vpack.c.bf16 %v966, %v966
    %969 = vrot.lane.b32.xlu0 %v967, 64
    %v970 = vpop.permute.xlu0 %969
    %v971 = vrot.slane %v360, 4
    %v974 = vsel %vm382, %v970, 0
    %976 = vmatprep.subr.bf16.mxu0 0
    %977 = vmatpush1.bf16.msra.mxu0 0
    %978 = vmatprep.subr.bf16.mxu0 0
    %979 = vmatpush1.bf16.msra.mxu0 0
    %980 = vmatprep.subr.bf16.mxu0 0
    %981 = vmatpush1.bf16.msra.mxu0 0
    %982 = vmatprep.subr.bf16.mxu0 0
    %983 = vmatpush1.bf16.msra.mxu0 0
    %984 = vmatprep.subr.bf16.mxu0 0
    %985 = vmatpush1.bf16.msra.mxu0 0
    %986 = vmatprep.subr.bf16.mxu0 0
    %987 = vmatpush1.bf16.msra.mxu0 0
    %988 = vmatprep.subr.bf16.mxu0 0
    %989 = vmatpush1.bf16.msra.mxu0 %v897
    %990 = vmatprep.subr.bf16.mxu0 0
    %991 = vmatpush1.bf16.msra.mxu0 %v896
    %992 = vmatprep.subr.bf16.mxu0 0
    %993 = vmatpush2.bf16.msra.mxu0 0
    %994 = vmatprep.subr.bf16.mxu0 0
    %995 = vmatpush2.bf16.msra.mxu0 0
    %996 = vmatprep.subr.bf16.mxu0 0
    %997 = vmatpush2.bf16.msra.mxu0 0
    %998 = vmatprep.subr.bf16.mxu0 0
    %999 = vmatpush2.bf16.msra.mxu0 0
    %1000 = vmatprep.subr.bf16.mxu0 0
    %1001 = vmatpush2.bf16.msra.mxu0 0
    %1002 = vmatprep.subr.bf16.mxu0 0
    %1003 = vmatpush2.bf16.msra.mxu0 0
    %1004 = vmatprep.subr.bf16.mxu0 0
    %1005 = vmatpush2.bf16.msra.mxu0 0
    %1006 = vmatprep.subr.bf16.mxu0 0
    %1007 = vmatpush2.bf16.msra.mxu0 0
    %1008 = vmatprep.mubr.bf16.mxu0 0
    %1009 = vmatmul.mubr.bf16.gmra.mxu0 %v974
    %v1010 = vpop.f32.mrf.mxu0
    %v1011 = vadd.f32 %v971, %v1010
    %v1012 = vpop.f32.mrf.mxu0
    %v1013 = vpop.f32.mrf.mxu0
    %v1014 = vpop.f32.mrf.mxu0
    %1015 = vdwg.mxu0
    %v1016 = vxor.u32 %v1011, 2147483648
    %v1017 = vmul.f32 %v1016, 1.442695
    %v1018 = vpow.pop %v1017
    %v1019 = vadd.f32 %v1018, 1.0
    %v1020 = vrcp.pop %v1019
    %v1021 = vmul.f32 1.0, %v1020
    %v1022 = vtanh.pop %v1011
    %v1023 = vmul.f32 %v1021, %v960
    %1025 = vrot.lane.b32.xlu0 %v1021, 96
    %v1026 = vpop.permute.xlu0 %1025
    %v1028 = vadd.f32 %v1023, %v1026
    %1030 = vrot.lane.b32.xlu0 %v1022, 32
    %v1031 = vpop.permute.xlu0 %1030
    %v1033 = vadd.f32 %v1028, %v1031
    %v1034 = vtanh.pop %v1033
    %1036 = vrot.lane.b32.xlu0 %v1034, 64
    %v1037 = vpop.permute.xlu0 %1036
    %v1039 = vmul.f32 %v1021, %v1037
    %v1040 = vpack.c.bf16 %v1039, %v1039
    %1042 = vrot.lane.b32.xlu0 %v1040, 64
    %v1043 = vpop.permute.xlu0 %1042
    %v1044 = vrot.slane %v360, 2
    %v1047 = vsel %vm382, %v1043, 0
    %1049 = vmatprep.subr.bf16.mxu0 0
    %1050 = vmatpush1.bf16.msra.mxu0 0
    %1051 = vmatprep.subr.bf16.mxu0 0
    %1052 = vmatpush1.bf16.msra.mxu0 0
    %1053 = vmatprep.subr.bf16.mxu0 0
    %1054 = vmatpush1.bf16.msra.mxu0 0
    %1055 = vmatprep.subr.bf16.mxu0 0
    %1056 = vmatpush1.bf16.msra.mxu0 0
    %1057 = vmatprep.subr.bf16.mxu0 0
    %1058 = vmatpush1.bf16.msra.mxu0 0
    %1059 = vmatprep.subr.bf16.mxu0 0
    %1060 = vmatpush1.bf16.msra.mxu0 0
    %1061 = vmatprep.subr.bf16.mxu0 0
    %1062 = vmatpush1.bf16.msra.mxu0 %v897
    %1063 = vmatprep.subr.bf16.mxu0 0
    %1064 = vmatpush1.bf16.msra.mxu0 %v896
    %1065 = vmatprep.subr.bf16.mxu0 0
    %1066 = vmatpush2.bf16.msra.mxu0 0
    %1067 = vmatprep.subr.bf16.mxu0 0
    %1068 = vmatpush2.bf16.msra.mxu0 0
    %1069 = vmatprep.subr.bf16.mxu0 0
    %1070 = vmatpush2.bf16.msra.mxu0 0
    %1071 = vmatprep.subr.bf16.mxu0 0
    %1072 = vmatpush2.bf16.msra.mxu0 0
    %1073 = vmatprep.subr.bf16.mxu0 0
    %1074 = vmatpush2.bf16.msra.mxu0 0
    %1075 = vmatprep.subr.bf16.mxu0 0
    %1076 = vmatpush2.bf16.msra.mxu0 0
    %1077 = vmatprep.subr.bf16.mxu0 0
    %1078 = vmatpush2.bf16.msra.mxu0 0
    %1079 = vmatprep.subr.bf16.mxu0 0
    %1080 = vmatpush2.bf16.msra.mxu0 0
    %1081 = vmatprep.mubr.bf16.mxu0 0
    %1082 = vmatmul.mubr.bf16.gmra.mxu0 %v1047
    %v1083 = vpop.f32.mrf.mxu0
    %v1084 = vadd.f32 %v1044, %v1083
    %v1085 = vpop.f32.mrf.mxu0
    %v1086 = vpop.f32.mrf.mxu0
    %v1087 = vpop.f32.mrf.mxu0
    %1088 = vdwg.mxu0
    %v1089 = vxor.u32 %v1084, 2147483648
    %v1090 = vmul.f32 %v1089, 1.442695
    %v1091 = vpow.pop %v1090
    %v1092 = vadd.f32 %v1091, 1.0
    %v1093 = vrcp.pop %v1092
    %v1094 = vmul.f32 1.0, %v1093
    %v1095 = vtanh.pop %v1084
    %v1096 = vmul.f32 %v1094, %v1033
    %1098 = vrot.lane.b32.xlu0 %v1094, 96
    %v1099 = vpop.permute.xlu0 %1098
    %v1101 = vadd.f32 %v1096, %v1099
    %1103 = vrot.lane.b32.xlu0 %v1095, 32
    %v1104 = vpop.permute.xlu0 %1103
    %v1106 = vadd.f32 %v1101, %v1104
    %v1107 = vtanh.pop %v1106
    %1109 = vrot.lane.b32.xlu0 %v1107, 64
    %v1110 = vpop.permute.xlu0 %1109
    %v1112 = vmul.f32 %v1094, %v1110
    %v1113 = vpack.c.bf16 %v1112, %v1112
    %1115 = vrot.lane.b32.xlu0 %v1113, 64
    %v1116 = vpop.permute.xlu0 %1115
    %v1118 = vsel %vm382, %v1116, 0
    %1120 = vmatprep.subr.bf16.mxu0 0
    %1121 = vmatpush1.bf16.msra.mxu0 0
    %1122 = vmatprep.subr.bf16.mxu0 0
    %1123 = vmatpush1.bf16.msra.mxu0 0
    %1124 = vmatprep.subr.bf16.mxu0 0
    %1125 = vmatpush1.bf16.msra.mxu0 0
    %1126 = vmatprep.subr.bf16.mxu0 0
    %1127 = vmatpush1.bf16.msra.mxu0 0
    %1128 = vmatprep.subr.bf16.mxu0 0
    %1129 = vmatpush1.bf16.msra.mxu0 0
    %1130 = vmatprep.subr.bf16.mxu0 0
    %1131 = vmatpush1.bf16.msra.mxu0 0
    %1132 = vmatprep.subr.bf16.mxu0 0
    %1133 = vmatpush1.bf16.msra.mxu0 %v897
    %1134 = vmatprep.subr.bf16.mxu0 0
    %1135 = vmatpush1.bf16.msra.mxu0 %v896
    %1136 = vmatprep.subr.bf16.mxu0 0
    %1137 = vmatpush2.bf16.msra.mxu0 0
    %1138 = vmatprep.subr.bf16.mxu0 0
    %1139 = vmatpush2.bf16.msra.mxu0 0
    %1140 = vmatprep.subr.bf16.mxu0 0
    %1141 = vmatpush2.bf16.msra.mxu0 0
    %1142 = vmatprep.subr.bf16.mxu0 0
    %1143 = vmatpush2.bf16.msra.mxu0 0
    %1144 = vmatprep.subr.bf16.mxu0 0
    %1145 = vmatpush2.bf16.msra.mxu0 0
    %1146 = vmatprep.subr.bf16.mxu0 0
    %1147 = vmatpush2.bf16.msra.mxu0 0
    %1148 = vmatprep.subr.bf16.mxu0 0
    %1149 = vmatpush2.bf16.msra.mxu0 0
    %1150 = vmatprep.subr.bf16.mxu0 0
    %1151 = vmatpush2.bf16.msra.mxu0 0
    %1152 = vmatprep.mubr.bf16.mxu0 0
    %1153 = vmatmul.mubr.bf16.gmra.mxu0 %v1118
    %v1154 = vpop.f32.mrf.mxu0
    %v1155 = vadd.f32 %v360, %v1154
    %v1156 = vpop.f32.mrf.mxu0
    %v1157 = vpop.f32.mrf.mxu0
    %v1158 = vpop.f32.mrf.mxu0
    %1159 = vdwg.mxu0
    %v1160 = vxor.u32 %v1155, 2147483648
    %v1161 = vmul.f32 %v1160, 1.442695
    %v1162 = vpow.pop %v1161
    %v1163 = vadd.f32 %v1162, 1.0
    %v1164 = vrcp.pop %v1163
    %v1165 = vmul.f32 1.0, %v1164
    %v1166 = vtanh.pop %v1155
    %v1167 = vmul.f32 %v1165, %v1106
    %1169 = vrot.lane.b32.xlu0 %v1165, 96
    %v1170 = vpop.permute.xlu0 %1169
    %v1172 = vadd.f32 %v1167, %v1170
    %1174 = vrot.lane.b32.xlu0 %v1166, 32
    %v1175 = vpop.permute.xlu0 %1174
    %v1177 = vadd.f32 %v1172, %v1175
    %v1178 = vtanh.pop %v1177
    %1180 = vrot.lane.b32.xlu0 %v1178, 64
    %v1181 = vpop.permute.xlu0 %1180
    %v1183 = vmul.f32 %v1165, %v1181
    %v1184 = vpack.c.bf16 %v1183, %v1183
    %1186 = vrot.lane.b32.xlu0 %v1184, 64
    %v1187 = vpop.permute.xlu0 %1186
    %v1189 = vrot.slane %v356, 6
    %v1192 = vsel %vm382, %v1187, 0
    %1194 = vmatprep.subr.bf16.mxu0 0
    %1195 = vmatpush1.bf16.msra.mxu0 0
    %1196 = vmatprep.subr.bf16.mxu0 0
    %1197 = vmatpush1.bf16.msra.mxu0 0
    %1198 = vmatprep.subr.bf16.mxu0 0
    %1199 = vmatpush1.bf16.msra.mxu0 0
    %1200 = vmatprep.subr.bf16.mxu0 0
    %1201 = vmatpush1.bf16.msra.mxu0 0
    %1202 = vmatprep.subr.bf16.mxu0 0
    %1203 = vmatpush1.bf16.msra.mxu0 0
    %1204 = vmatprep.subr.bf16.mxu0 0
    %1205 = vmatpush1.bf16.msra.mxu0 0
    %1206 = vmatprep.subr.bf16.mxu0 0
    %1207 = vmatpush1.bf16.msra.mxu0 %v897
    %1208 = vmatprep.subr.bf16.mxu0 0
    %1209 = vmatpush1.bf16.msra.mxu0 %v896
    %1210 = vmatprep.subr.bf16.mxu0 0
    %1211 = vmatpush2.bf16.msra.mxu0 0
    %1212 = vmatprep.subr.bf16.mxu0 0
    %1213 = vmatpush2.bf16.msra.mxu0 0
    %1214 = vmatprep.subr.bf16.mxu0 0
    %1215 = vmatpush2.bf16.msra.mxu0 0
    %1216 = vmatprep.subr.bf16.mxu0 0
    %1217 = vmatpush2.bf16.msra.mxu0 0
    %1218 = vmatprep.subr.bf16.mxu0 0
    %1219 = vmatpush2.bf16.msra.mxu0 0
    %1220 = vmatprep.subr.bf16.mxu0 0
    %1221 = vmatpush2.bf16.msra.mxu0 0
    %1222 = vmatprep.subr.bf16.mxu0 0
    %1223 = vmatpush2.bf16.msra.mxu0 0
    %1224 = vmatprep.subr.bf16.mxu0 0
    %1225 = vmatpush2.bf16.msra.mxu0 0
    %1226 = vmatprep.mubr.bf16.mxu0 0
    %1227 = vmatmul.mubr.bf16.gmra.mxu0 %v1192
    %v1228 = vpop.f32.mrf.mxu0
    %v1229 = vadd.f32 %v1189, %v1228
    %v1230 = vpop.f32.mrf.mxu0
    %v1231 = vpop.f32.mrf.mxu0
    %v1232 = vpop.f32.mrf.mxu0
    %1233 = vdwg.mxu0
    %v1234 = vxor.u32 %v1229, 2147483648
    %v1235 = vmul.f32 %v1234, 1.442695
    %v1236 = vpow.pop %v1235
    %v1237 = vadd.f32 %v1236, 1.0
    %v1238 = vrcp.pop %v1237
    %v1239 = vmul.f32 1.0, %v1238
    %v1240 = vtanh.pop %v1229
    %v1241 = vmul.f32 %v1239, %v1177
    %1243 = vrot.lane.b32.xlu0 %v1239, 96
    %v1244 = vpop.permute.xlu0 %1243
    %v1246 = vadd.f32 %v1241, %v1244
    %1248 = vrot.lane.b32.xlu0 %v1240, 32
    %v1249 = vpop.permute.xlu0 %1248
    %v1251 = vadd.f32 %v1246, %v1249
    %v1252 = vtanh.pop %v1251
    %1254 = vrot.lane.b32.xlu0 %v1252, 64
    %v1255 = vpop.permute.xlu0 %1254
    %v1257 = vmul.f32 %v1239, %v1255
    %v1258 = vpack.c.bf16 %v1257, %v1257
    %1260 = vrot.lane.b32.xlu0 %v1258, 64
    %v1261 = vpop.permute.xlu0 %1260
    %v1262 = vrot.slane %v356, 4
    %v1265 = vsel %vm382, %v1261, 0
    %1267 = vmatprep.subr.bf16.mxu0 0
    %1268 = vmatpush1.bf16.msra.mxu0 0
    %1269 = vmatprep.subr.bf16.mxu0 0
    %1270 = vmatpush1.bf16.msra.mxu0 0
    %1271 = vmatprep.subr.bf16.mxu0 0
    %1272 = vmatpush1.bf16.msra.mxu0 0
    %1273 = vmatprep.subr.bf16.mxu0 0
    %1274 = vmatpush1.bf16.msra.mxu0 0
    %1275 = vmatprep.subr.bf16.mxu0 0
    %1276 = vmatpush1.bf16.msra.mxu0 0
    %1277 = vmatprep.subr.bf16.mxu0 0
    %1278 = vmatpush1.bf16.msra.mxu0 0
    %1279 = vmatprep.subr.bf16.mxu0 0
    %1280 = vmatpush1.bf16.msra.mxu0 %v897
    %1281 = vmatprep.subr.bf16.mxu0 0
    %1282 = vmatpush1.bf16.msra.mxu0 %v896
    %1283 = vmatprep.subr.bf16.mxu0 0
    %1284 = vmatpush2.bf16.msra.mxu0 0
    %1285 = vmatprep.subr.bf16.mxu0 0
    %1286 = vmatpush2.bf16.msra.mxu0 0
    %1287 = vmatprep.subr.bf16.mxu0 0
    %1288 = vmatpush2.bf16.msra.mxu0 0
    %1289 = vmatprep.subr.bf16.mxu0 0
    %1290 = vmatpush2.bf16.msra.mxu0 0
    %1291 = vmatprep.subr.bf16.mxu0 0
    %1292 = vmatpush2.bf16.msra.mxu0 0
    %1293 = vmatprep.subr.bf16.mxu0 0
    %1294 = vmatpush2.bf16.msra.mxu0 0
    %1295 = vmatprep.subr.bf16.mxu0 0
    %1296 = vmatpush2.bf16.msra.mxu0 0
    %1297 = vmatprep.subr.bf16.mxu0 0
    %1298 = vmatpush2.bf16.msra.mxu0 0
    %1299 = vmatprep.mubr.bf16.mxu0 0
    %1300 = vmatmul.mubr.bf16.gmra.mxu0 %v1265
    %v1301 = vpop.f32.mrf.mxu0
    %v1302 = vadd.f32 %v1262, %v1301
    %v1303 = vpop.f32.mrf.mxu0
    %v1304 = vpop.f32.mrf.mxu0
    %v1305 = vpop.f32.mrf.mxu0
    %1306 = vdwg.mxu0
    %v1307 = vxor.u32 %v1302, 2147483648
    %v1308 = vmul.f32 %v1307, 1.442695
    %v1309 = vpow.pop %v1308
    %v1310 = vadd.f32 %v1309, 1.0
    %v1311 = vrcp.pop %v1310
    %v1312 = vmul.f32 1.0, %v1311
    %v1313 = vtanh.pop %v1302
    %v1314 = vmul.f32 %v1312, %v1251
    %1316 = vrot.lane.b32.xlu0 %v1312, 96
    %v1317 = vpop.permute.xlu0 %1316
    %v1319 = vadd.f32 %v1314, %v1317
    %1321 = vrot.lane.b32.xlu0 %v1313, 32
    %v1322 = vpop.permute.xlu0 %1321
    %v1324 = vadd.f32 %v1319, %v1322
    %v1325 = vtanh.pop %v1324
    %1327 = vrot.lane.b32.xlu0 %v1325, 64
    %v1328 = vpop.permute.xlu0 %1327
    %v1330 = vmul.f32 %v1312, %v1328
    %v1331 = vpack.c.bf16 %v1330, %v1330
    %1333 = vrot.lane.b32.xlu0 %v1331, 64
    %v1334 = vpop.permute.xlu0 %1333
    %v1335 = vrot.slane %v356, 2
    %v1338 = vsel %vm382, %v1334, 0
    %1340 = vmatprep.subr.bf16.mxu0 0
    %1341 = vmatpush1.bf16.msra.mxu0 0
    %1342 = vmatprep.subr.bf16.mxu0 0
    %1343 = vmatpush1.bf16.msra.mxu0 0
    %1344 = vmatprep.subr.bf16.mxu0 0
    %1345 = vmatpush1.bf16.msra.mxu0 0
    %1346 = vmatprep.subr.bf16.mxu0 0
    %1347 = vmatpush1.bf16.msra.mxu0 0
    %1348 = vmatprep.subr.bf16.mxu0 0
    %1349 = vmatpush1.bf16.msra.mxu0 0
    %1350 = vmatprep.subr.bf16.mxu0 0
    %1351 = vmatpush1.bf16.msra.mxu0 0
    %1352 = vmatprep.subr.bf16.mxu0 0
    %1353 = vmatpush1.bf16.msra.mxu0 %v897
    %1354 = vmatprep.subr.bf16.mxu0 0
    %1355 = vmatpush1.bf16.msra.mxu0 %v896
    %1356 = vmatprep.subr.bf16.mxu0 0
    %1357 = vmatpush2.bf16.msra.mxu0 0
    %1358 = vmatprep.subr.bf16.mxu0 0
    %1359 = vmatpush2.bf16.msra.mxu0 0
    %1360 = vmatprep.subr.bf16.mxu0 0
    %1361 = vmatpush2.bf16.msra.mxu0 0
    %1362 = vmatprep.subr.bf16.mxu0 0
    %1363 = vmatpush2.bf16.msra.mxu0 0
    %1364 = vmatprep.subr.bf16.mxu0 0
    %1365 = vmatpush2.bf16.msra.mxu0 0
    %1366 = vmatprep.subr.bf16.mxu0 0
    %1367 = vmatpush2.bf16.msra.mxu0 0
    %1368 = vmatprep.subr.bf16.mxu0 0
    %1369 = vmatpush2.bf16.msra.mxu0 0
    %1370 = vmatprep.subr.bf16.mxu0 0
    %1371 = vmatpush2.bf16.msra.mxu0 0
    %1372 = vmatprep.mubr.bf16.mxu0 0
    %1373 = vmatmul.mubr.bf16.gmra.mxu0 %v1338
    %v1374 = vpop.f32.mrf.mxu0
    %v1375 = vadd.f32 %v1335, %v1374
    %v1376 = vpop.f32.mrf.mxu0
    %v1377 = vpop.f32.mrf.mxu0
    %v1378 = vpop.f32.mrf.mxu0
    %1379 = vdwg.mxu0
    %v1380 = vxor.u32 %v1375, 2147483648
    %v1381 = vmul.f32 %v1380, 1.442695
    %v1382 = vpow.pop %v1381
    %v1383 = vadd.f32 %v1382, 1.0
    %v1384 = vrcp.pop %v1383
    %v1385 = vmul.f32 1.0, %v1384
    %v1386 = vtanh.pop %v1375
    %v1387 = vmul.f32 %v1385, %v1324
    %1389 = vrot.lane.b32.xlu0 %v1385, 96
    %v1390 = vpop.permute.xlu0 %1389
    %v1392 = vadd.f32 %v1387, %v1390
    %1394 = vrot.lane.b32.xlu0 %v1386, 32
    %v1395 = vpop.permute.xlu0 %1394
    %v1397 = vadd.f32 %v1392, %v1395
    %v1398 = vtanh.pop %v1397
    %1400 = vrot.lane.b32.xlu0 %v1398, 64
    %v1401 = vpop.permute.xlu0 %1400
    %v1403 = vmul.f32 %v1385, %v1401
    %1405 = vrot.lane.b32.xlu0 %v1403, 96
    %v1406 = vpop.permute.xlu0 %1405
    %v1408 = vsel %vm382, 0.0, %v1406
    %1410 = vrot.lane.b32.xlu0 %v449, 64
    %v1411 = vpop.permute.xlu0 %1410
    %1414 = vrot.lane.b32.xlu0 %v1330, 96
    %v1415 = vpop.permute.xlu0 %1414
    %v1417 = vsel %vm382, %v1411, %v1415
    %1419 = vrot.lane.b32.xlu0 %v523, 64
    %v1420 = vpop.permute.xlu0 %1419
    %1423 = vrot.lane.b32.xlu0 %v1257, 96
    %v1424 = vpop.permute.xlu0 %1423
    %v1426 = vsel %vm382, %v1420, %v1424
    %1428 = vrot.lane.b32.xlu0 %v596, 64
    %v1429 = vpop.permute.xlu0 %1428
    %1432 = vrot.lane.b32.xlu0 %v1183, 96
    %v1433 = vpop.permute.xlu0 %1432
    %v1435 = vsel %vm382, %v1429, %v1433
    %1437 = vrot.lane.b32.xlu0 %v669, 64
    %v1438 = vpop.permute.xlu0 %1437
    %1441 = vrot.lane.b32.xlu0 %v1112, 96
    %v1442 = vpop.permute.xlu0 %1441
    %v1444 = vsel %vm382, %v1438, %v1442
    %1446 = vrot.lane.b32.xlu0 %v740, 64
    %v1447 = vpop.permute.xlu0 %1446
    %1450 = vrot.lane.b32.xlu0 %v1039, 96
    %v1451 = vpop.permute.xlu0 %1450
    %v1453 = vsel %vm382, %v1447, %v1451
    %1455 = vrot.lane.b32.xlu0 %v814, 64
    %v1456 = vpop.permute.xlu0 %1455
    %1459 = vrot.lane.b32.xlu0 %v966, 96
    %v1460 = vpop.permute.xlu0 %1459
    %v1462 = vsel %vm382, %v1456, %v1460
    %1464 = vrot.lane.b32.xlu0 %v887, 64
    %v1465 = vpop.permute.xlu0 %1464
    %v1467 = vsel %vm382, %v1465, 0.0
    %v1469 = vrot.slane %v1417, 6
    %v1472 = vrot.slane %v1426, 4
    %v1475 = vrot.slane %v1435, 2
    %v1478 = vrot.slane %v1453, 6
    %v1481 = vrot.slane %v1462, 4
    %v1484 = vrot.slane %v1467, 2
    %v1486 = vsel %vm191, %v1408, %v1469
    %v1487 = vsel %vm195, %v1486, %v1472
    %v1488 = vsel %vm199, %v1487, %v1475
    %v1489 = vsel %vm191, %v1444, %v1478
    %v1490 = vsel %vm195, %v1489, %v1481
    %v1491 = vsel %vm199, %v1490, %v1484
    %v1492 = vpack.c.bf16 %v1491, %v1488
    %v1493 = vld [vmem:[#allocation10] sm:$0xf]
    %v1494 = vld [vmem:[#allocation10 + $0x4] sm:$0xf]
    %v1495 = vld [vmem:[#allocation10 + $0x8] sm:$0xf]
    %v1496 = vld [vmem:[#allocation10 + $0xc] sm:$0xf]
    %v1497 = vld [vmem:[#allocation10 + $0x10] sm:$0xf]
    %v1498 = vld [vmem:[#allocation10 + $0x14] sm:$0xf]
    %v1499 = vld [vmem:[#allocation10 + $0x18] sm:$0xf]
    %v1500 = vld [vmem:[#allocation10 + $0x1c] sm:$0xf]
    %v1501 = vld [vmem:[%s7] sm:$0x1]
    %v1503 = vlaneseq
    %v1504 = vshrl.u32 %v1503, 7
    %v1505 = vsub.s32 0, %v1504
    %v1506 = vrot.slane %v1501, %v1505
    %v1516 = vunpack.c.l.b16 %v1493
    %v1517 = vunpack.c.l.b16 %v1494
    %v1518 = vunpack.c.l.b16 %v1495
    %v1519 = vunpack.c.l.b16 %v1496
    %v1520 = vunpack.c.l.b16 %v1497
    %v1521 = vunpack.c.l.b16 %v1498
    %v1522 = vunpack.c.l.b16 %v1499
    %v1523 = vunpack.c.l.b16 %v1500
    %v1524 = vpack.c.b16 %v1517, %v1516
    %v1525 = vpack.c.b16 %v1519, %v1518
    %v1526 = vpack.c.b16 %v1521, %v1520
    %v1527 = vpack.c.b16 %v1523, %v1522
    %vm1532 = vcmask 523264
    %v1534 = vsel %vm1532, %v1492, 0
    %1536 = vmatprep.subr.bf16.mxu0 0
    %1537 = vmatpush1.bf16.msra.mxu0 0
    %1538 = vmatprep.subr.bf16.mxu0 0
    %1539 = vmatpush1.bf16.msra.mxu0 0
    %1540 = vmatprep.subr.bf16.mxu0 0
    %1541 = vmatpush1.bf16.msra.mxu0 0
    %1542 = vmatprep.subr.bf16.mxu0 0
    %1543 = vmatpush1.bf16.msra.mxu0 0
    %1544 = vmatprep.subr.bf16.mxu0 0
    %1545 = vmatpush1.bf16.msra.mxu0 %v1527
    %1546 = vmatprep.subr.bf16.mxu0 0
    %1547 = vmatpush1.bf16.msra.mxu0 %v1526
    %1548 = vmatprep.subr.bf16.mxu0 0
    %1549 = vmatpush1.bf16.msra.mxu0 %v1525
    %1550 = vmatprep.subr.bf16.mxu0 0
    %1551 = vmatpush1.bf16.msra.mxu0 %v1524
    %1552 = vmatprep.subr.bf16.mxu0 0
    %1553 = vmatpush2.bf16.msra.mxu0 0
    %1554 = vmatprep.subr.bf16.mxu0 0
    %1555 = vmatpush2.bf16.msra.mxu0 0
    %1556 = vmatprep.subr.bf16.mxu0 0
    %1557 = vmatpush2.bf16.msra.mxu0 0
    %1558 = vmatprep.subr.bf16.mxu0 0
    %1559 = vmatpush2.bf16.msra.mxu0 0
    %1560 = vmatprep.subr.bf16.mxu0 0
    %1561 = vmatpush2.bf16.msra.mxu0 0
    %1562 = vmatprep.subr.bf16.mxu0 0
    %1563 = vmatpush2.bf16.msra.mxu0 0
    %1564 = vmatprep.subr.bf16.mxu0 0
    %1565 = vmatpush2.bf16.msra.mxu0 0
    %1566 = vmatprep.subr.bf16.mxu0 0
    %1567 = vmatpush2.bf16.msra.mxu0 0
    %1568 = vmatprep.mubr.bf16.mxu0 0
    %1569 = vmatmul.mubr.bf16.gmra.mxu0 %v1534
    %v1570 = vpop.f32.mrf.mxu0
    %v1571 = vadd.f32 %v1506, %v1570
    %v1572 = vpop.f32.mrf.mxu0
    %v1573 = vpop.f32.mrf.mxu0
    %v1574 = vadd.f32 %v1506, %v1573
    %v1575 = vpop.f32.mrf.mxu0
    %1576 = vdwg.mxu0
    %1577 = vmax.xlane.f32.xlu0 %v1571
    %v1578 = vpop.xlane.xlu0 %1577
    %1579 = vmax.xlane.f32.xlu0 %v1574
    %v1580 = vpop.xlane.xlu0 %1579
    %v1581 = vsub.f32 %v1571, %v1578
    %v1582 = vsub.f32 %v1574, %v1580
    %v1583 = vmul.f32 %v1581, 1.442695
    %v1584 = vpow.pop %v1583
    %v1585 = vmul.f32 %v1582, 1.442695
    %v1586 = vpow.pop %v1585
    %1587 = vadd.xlane.f32.xlu0 %v1584
    %v1588 = vpop.xlane.xlu0 %1587
    %1589 = vadd.xlane.f32.xlu0 %v1586
    %v1590 = vpop.xlane.xlu0 %1589
    %v1591 = vlog2.pop %v1588
    %v1592 = vmul.f32 %v1591, 0.6931472
    %v1593 = vlog2.pop %v1590
    %v1594 = vmul.f32 %v1593, 0.6931472
    %v1595 = vadd.f32 %v1578, %v1592
    %v1596 = vadd.f32 %v1580, %v1594
    %v1597 = vsub.f32 %v1571, %v1595
    %v1598 = vsub.f32 %v1574, %v1596
    %1599 = vst [vmem:[#allocation12] sm:$0xff] %v1597
    %1600 = vst [vmem:[#allocation12 + $0x8] sm:$0xff] %v1598
    // Predicated region
    $region54: #{bilstm_forward.1} parent=1 // pred_check
      _
    $region55: #{bilstm_forward.1} parent=1 // pred_check_branch
      %1602 = sbr.rel (0) target = $region57
    $region56: #{bilstm_forward.1} parent=1 // pred_region
      %s1604 = ssub.s32 256, 256
      %1605 = vsyncadd [#allocation4], %s1604
      %s1606 = sshll.u32 [#allocation12], 4
      %s1607 = int_to_ptr.vmem [resolvable:$true] %s1606
      %1612 = dma.vmem_to_hbm [thread:$0]  %s1607, 256, %s8, [#allocation4], 128, 128, 8
    $region57: #{bilstm_forward.1} parent=1 // pred_fallthru
      _
    // Predicated region
    $region58: #{bilstm_forward.1} parent=1 // pred_check
      _
    $region59: #{bilstm_forward.1} parent=1 // pred_check_branch
      %1614 = sbr.rel (0) target = $region61
    $region60: #{bilstm_forward.1} parent=1 // pred_region
      %1615 = dma.done [#allocation4], 256
    $region61: #{bilstm_forward.1} parent=1 // pred_fallthru
      _
    %1616 = vsyncpa [#allocation3], 1
    %1617 = vsyncpa [#allocation8], 1
    %1618 = vsyncpa [#allocation11], 1
    %1619 = vsyncpa [#allocation4], 1
    %1620 = vsyncpa [#allocation5], 1

</llo_original>
